<compile_context>
chip_gen: v7x
topology: tpu7x:2x2x1
jax: 0.10.0
libtpu: 0.0.40
codegen_flags: <defaults>
</compile_context>

<pallas_src>
import jax
import jax.numpy as jnp
import numpy as np
from jax import lax
from jax.experimental import pallas as pl
from jax.experimental.pallas import tpu as pltpu


# ---------------------------------------------------------------------------
# Pass 1: transposed-conv (direct conv over dilated input) + partial BN stats
# ---------------------------------------------------------------------------

def _make_conv_stats_kernel(Ho, Wo, Cp):
    def kernel(x0_ref, x1_ref, x2_ref, w_ref, y_ref, st_ref):
        # x{kd}_ref : (Hp, Wp, Cin)  bf16  -- dilated-input plane at depth od+kd
        # w_ref     : (27, Cin, Cp)  bf16  -- flipped taps, Cout padded to Cp
        # y_ref     : (Ho, Wo, Cp)   f32   -- conv output block for (n, od)
        # st_ref    : (2, Cp)        f32   -- per-block [sum, sum_sq]
        st_ref[...] = jnp.zeros_like(st_ref)
        x_refs = (x0_ref, x1_ref, x2_ref)

        @pl.loop(0, Ho)
        def _(oh):
            acc = jnp.zeros((Wo, Cp), jnp.float32)
            for kd in range(3):
                for kh in range(3):
                    for kw in range(3):
                        tap = (kd * 3 + kh) * 3 + kw
                        # shifted view of the dilated input: (Wo, Cin) bf16
                        a = x_refs[kd][oh + kh, kw:kw + Wo, :]
                        acc = acc + jnp.dot(
                            a, w_ref[tap],
                            preferred_element_type=jnp.float32)
            y_ref[oh] = acc
            st_ref[0, :] = st_ref[0, :] + jnp.sum(acc, axis=0)
            st_ref[1, :] = st_ref[1, :] + jnp.sum(acc * acc, axis=0)

    return kernel


def _conv_stats_pass(x_dil, w_taps, N, Do, Ho, Wo, Hp, Wp, Cin, Cp):
    kernel = _make_conv_stats_kernel(Ho, Wo, Cp)
    flops = 2 * N * Do * Ho * Wo * 27 * Cin * Cp
    bytes_accessed = (3 * x_dil.size * 2            # bf16 activations (3 shifted reads)
                      + w_taps.size * 2             # bf16 weights
                      + N * Do * Ho * Wo * Cp * 4   # f32 conv output
                      + N * Do * 2 * Cp * 4)        # f32 partial stats
    y, stats = pl.pallas_call(
        kernel,
        out_shape=(
            jax.ShapeDtypeStruct((N, Do, Ho, Wo, Cp), jnp.float32),
            jax.ShapeDtypeStruct((N, Do, 2, Cp), jnp.float32),
        ),
        grid=(N, Do),
        in_specs=[
            # same dilated tensor, three depth-shifted views (kd = 0, 1, 2)
            pl.BlockSpec((None, None, Hp, Wp, Cin),
                         lambda n, od: (n, od + 0, 0, 0, 0)),
            pl.BlockSpec((None, None, Hp, Wp, Cin),
                         lambda n, od: (n, od + 1, 0, 0, 0)),
            pl.BlockSpec((None, None, Hp, Wp, Cin),
                         lambda n, od: (n, od + 2, 0, 0, 0)),
            # flipped conv taps, resident across the whole grid
            pl.BlockSpec((27, Cin, Cp), lambda n, od: (0, 0, 0)),
        ],
        out_specs=(
            pl.BlockSpec((None, None, Ho, Wo, Cp),
                         lambda n, od: (n, od, 0, 0, 0)),
            pl.BlockSpec((None, None, 2, Cp),
                         lambda n, od: (n, od, 0, 0)),
        ),
        compiler_params=pltpu.CompilerParams(
            dimension_semantics=("parallel", "parallel"),
            vmem_limit_bytes=32 * 1024 * 1024),
        cost_estimate=pl.CostEstimate(flops=flops, transcendentals=0,
                                      bytes_accessed=bytes_accessed),
    )(x_dil, x_dil, x_dil, w_taps)
    return y, stats


# ---------------------------------------------------------------------------
# Pass 2: folded BatchNorm (scale/shift) + LeakyReLU(0.2), lane-dense blocks
# ---------------------------------------------------------------------------

def _bn_apply_kernel(y_ref, scale_ref, shift_ref, o_ref):
    z = y_ref[...] * scale_ref[...] + shift_ref[...]
    o_ref[...] = jnp.where(z > 0, z, 0.2 * z)


def _bn_apply_pass(y, scale, shift, N, Do, Ho, Wo, Cp):
    return pl.pallas_call(
        _bn_apply_kernel,
        out_shape=jax.ShapeDtypeStruct((N, Do, Ho, Wo, Cp), jnp.float32),
        grid=(N, Do),
        in_specs=[
            pl.BlockSpec((None, None, Ho, Wo, Cp),
                         lambda n, od: (n, od, 0, 0, 0)),
            pl.BlockSpec((1, Cp), lambda n, od: (0, 0)),
            pl.BlockSpec((1, Cp), lambda n, od: (0, 0)),
        ],
        out_specs=pl.BlockSpec((None, None, Ho, Wo, Cp),
                               lambda n, od: (n, od, 0, 0, 0)),
        compiler_params=pltpu.CompilerParams(
            dimension_semantics=("parallel", "parallel"),
            vmem_limit_bytes=32 * 1024 * 1024),
    )(y, scale, shift)


# ------------------------------ JAX wrapper --------------------------------

def conv_trans_block_3d_forward(x, conv_w, conv_b, gamma, beta):
    """
    x:       (N, Cin, D, H, W)
    conv_w:  (Cin, Cout, 3, 3, 3)   -- PyTorch ConvTranspose3d weight layout
    conv_b, gamma, beta: (Cout,)
    returns: (N, Cout, 2D, 2H, 2W)  float32
    """
    del conv_b  # cancels exactly under training-mode BatchNorm (folded away)

    N, Cin, D, H, W = x.shape
    Cout = conv_w.shape[1]
    Do, Ho, Wo = 2 * D, 2 * H, 2 * W
    Dp, Hp, Wp = Do + 2, Ho + 2, Wo + 2
    Cp = ((Cout + 127) // 128) * 128          # lane-dense padded channel count

    # channels-last + zero-dilation (k=3,s=2,p=1,op=1  ->  pad (1,2), dilate 2)
    x_cl = jnp.transpose(x, (0, 2, 3, 4, 1)).astype(jnp.bfloat16)
    x_dil = jnp.zeros((N, Dp, Hp, Wp, Cin), jnp.bfloat16)
    x_dil = x_dil.at[:, 1:2 * D:2, 1:2 * H:2, 1:2 * W:2, :].set(x_cl)

    # ConvTranspose weight -> flipped direct-conv taps, (27, Cin, Cp) bf16
    w_taps = jnp.flip(conv_w, axis=(2, 3, 4)).transpose(2, 3, 4, 0, 1)
    w_taps = w_taps.reshape(27, Cin, Cout)
    w_taps = jnp.pad(w_taps, ((0, 0), (0, 0), (0, Cp - Cout)))
    w_taps = w_taps.astype(jnp.bfloat16)

    # pass 1: conv (bf16 MXU, f32 accumulate) + partial BN statistics
    y, stats = _conv_stats_pass(x_dil, w_taps, N, Do, Ho, Wo, Hp, Wp, Cin, Cp)

    # tiny stats reduction + BN constant folding (all f32)
    s = jnp.sum(stats, axis=(0, 1))                          # (2, Cp)
    cnt = float(N * Do * Ho * Wo)
    mean = s[0] / cnt
    var = jnp.maximum(s[1] / cnt - mean * mean, 0.0)         # biased variance
    gamma_p = jnp.zeros((Cp,), jnp.float32).at[:Cout].set(gamma.astype(jnp.float32))
    beta_p = jnp.zeros((Cp,), jnp.float32).at[:Cout].set(beta.astype(jnp.float32))
    scale = gamma_p * lax.rsqrt(var + 1e-5)
    shift = beta_p - mean * scale

    # pass 2: normalize + LeakyReLU(0.2)
    out = _bn_apply_pass(y, scale.reshape(1, Cp), shift.reshape(1, Cp),
                         N, Do, Ho, Wo, Cp)

    out = out[..., :Cout]                                    # drop channel pad
    return jnp.transpose(out, (0, 4, 1, 2, 3))               # back to NCDHW


# --------------------------- pure-JAX reference ----------------------------

def reference_forward(x, conv_w, conv_b, gamma, beta):
    # ConvTranspose3d(k=3,s=2,p=1,op=1) == conv over lhs-dilated input with the
    # flipped kernel and asymmetric padding (1, 2).
    w_conv = jnp.flip(conv_w, axis=(2, 3, 4)).transpose(1, 0, 2, 3, 4)
    y = lax.conv_general_dilated(
        x.astype(jnp.float32), w_conv.astype(jnp.float32),
        window_strides=(1, 1, 1),
        padding=((1, 2), (1, 2), (1, 2)),
        lhs_dilation=(2, 2, 2),
        dimension_numbers=("NCDHW", "OIDHW", "NCDHW"))
    y = y + conv_b.reshape(1, -1, 1, 1, 1)
    mean = jnp.mean(y, axis=(0, 2, 3, 4), keepdims=True)
    var = jnp.mean((y - mean) ** 2, axis=(0, 2, 3, 4), keepdims=True)
    y = (y - mean) * lax.rsqrt(var + 1e-5)
    y = y * gamma.reshape(1, -1, 1, 1, 1) + beta.reshape(1, -1, 1, 1, 1)
    return jnp.where(y > 0, y, 0.2 * y)


# --------------------------------- main ------------------------------------

if __name__ == "__main__":
    key = jax.random.PRNGKey(0)
    k_x, k_w, k_b, k_g, k_be = jax.random.split(key, 5)

    N, Cin, Cout = 2, 4, 8
    D, H, W = 8, 8, 8

    x = jax.random.normal(k_x, (N, Cin, D, H, W), jnp.float32)

    fan_in = Cin * 27
    bound = 1.0 / np.sqrt(fan_in)
    conv_w = jax.random.uniform(k_w, (Cin, Cout, 3, 3, 3), jnp.float32,
                                -bound, bound)
    conv_b = jax.random.uniform(k_b, (Cout,), jnp.float32, -bound, bound)
    gamma = 1.0 + 0.1 * jax.random.normal(k_g, (Cout,), jnp.float32)
    beta = 0.1 * jax.random.normal(k_be, (Cout,), jnp.float32)

    out = conv_trans_block_3d_forward(x, conv_w, conv_b, gamma, beta)
    out = jax.block_until_ready(out)

    ref = jax.block_until_ready(
        reference_forward(x, conv_w, conv_b, gamma, beta))

    assert out.shape == (N, Cout, 2 * D, 2 * H, 2 * W), out.shape
    # bf16 matmul operands (f32 accumulation / BN) -> relaxed tolerance
    np.testing.assert_allclose(np.asarray(out), np.asarray(ref),
                               rtol=5e-2, atol=5e-2)
    print("KERNEL_OK")
</pallas_src>

<mosaic_0001>
module attributes {stable_mosaic.version = 11 : i64} {
  func.func @kernel(%arg0: i32, %arg1: i32, %arg2: memref<1x1x18x18x4xbf16, #tpu.memory_space<vmem>>, %arg3: memref<1x1x18x18x4xbf16, #tpu.memory_space<vmem>>, %arg4: memref<1x1x18x18x4xbf16, #tpu.memory_space<vmem>>, %arg5: memref<27x4x128xbf16, #tpu.memory_space<vmem>>, %arg6: memref<1x1x16x16x128xf32, #tpu.memory_space<vmem>>, %arg7: memref<1x1x2x128xf32, #tpu.memory_space<vmem>>) attributes {dimension_semantics = [#tpu.dimension_semantics<parallel>, #tpu.dimension_semantics<parallel>], iteration_bounds = array<i64: 2, 16>, scalar_prefetch = 0 : i64, scratch_operands = 0 : i64, tpu.core_type = #tpu.core_type<tc>, window_params = [{transform_indices = @transform_0, window_bounds = array<i64: 1, 1, 18, 18, 4>}, {transform_indices = @transform_1, window_bounds = array<i64: 1, 1, 18, 18, 4>}, {transform_indices = @transform_2, window_bounds = array<i64: 1, 1, 18, 18, 4>}, {pipeline_mode = #tpu.pipeline_mode<synchronous>, transform_indices = @transform_3, window_bounds = array<i64: 27, 4, 128>}, {transform_indices = @transform_4, window_bounds = array<i64: 1, 1, 16, 16, 128>}, {transform_indices = @transform_5, window_bounds = array<i64: 1, 1, 2, 128>}]} {
    %cst = arith.constant 0.000000e+00 : f32
    %0 = vector.broadcast %cst : f32 to vector<2x128xf32>
    %c0 = arith.constant 0 : index
    %c0_0 = arith.constant 0 : index
    %c0_1 = arith.constant 0 : index
    %c0_2 = arith.constant 0 : index
    %1 = vector.load %arg7[%c0, %c0_0, %c0_1, %c0_2] : memref<1x1x2x128xf32, #tpu.memory_space<vmem>>, vector<1x1x2x128xf32>
    %2 = vector.shape_cast %1 : vector<1x1x2x128xf32> to vector<2x128xf32>
    %3 = vector.shape_cast %0 : vector<2x128xf32> to vector<1x1x2x128xf32>
    tpu.vector_store %arg7[%c0, %c0_0, %c0_1, %c0_2], %3 {strides = array<i32>} : memref<1x1x2x128xf32, #tpu.memory_space<vmem>>, vector<1x1x2x128xf32>,
    %c0_i32 = arith.constant 0 : i32
    %c16_i32 = arith.constant 16 : i32
    %4 = arith.addi %c0_i32, %c16_i32 : i32
    %c1_i32 = arith.constant 1 : i32
    scf.for %arg8 = %c0_i32 to %4 step %c1_i32  : i32 {
      %c1_i32_4 = arith.constant 1 : i32
      %5 = arith.muli %arg8, %c1_i32_4 : i32
      %c0_i32_5 = arith.constant 0 : i32
      %6 = arith.addi %c0_i32_5, %5 : i32
      %cst_6 = arith.constant 0.000000e+00 : f32
      %7 = vector.broadcast %cst_6 : f32 to vector<16x128xf32>
      %c0_i32_7 = arith.constant 0 : i32
      %8 = arith.addi %6, %c0_i32_7 : i32
      %c0_8 = arith.constant 0 : index
      %c0_9 = arith.constant 0 : index
      %9 = arith.index_cast %8 : i32 to index
      %c0_10 = arith.constant 0 : index
      %c0_11 = arith.constant 0 : index
      %10 = vector.load %arg2[%c0_8, %c0_9, %9, %c0_10, %c0_11] : memref<1x1x18x18x4xbf16, #tpu.memory_space<vmem>>, vector<1x1x1x16x4xbf16>
      %11 = vector.shape_cast %10 : vector<1x1x1x16x4xbf16> to vector<16x4xbf16>
      %c0_12 = arith.constant 0 : index
      %c0_13 = arith.constant 0 : index
      %c0_14 = arith.constant 0 : index
      %12 = vector.load %arg5[%c0_12, %c0_13, %c0_14] : memref<27x4x128xbf16, #tpu.memory_space<vmem>>, vector<1x4x128xbf16>
      %13 = vector.shape_cast %12 : vector<1x4x128xbf16> to vector<4x128xbf16>
      %cst_15 = arith.constant dense<0.000000e+00> : vector<16x128xf32>
      %14 = tpu.matmul %11, %13, %cst_15 {dimension_numbers = #tpu.dot_dimension_numbers<[1], [0], [0], [1], [0, 0, 1, 1], [], []>} : vector<16x4xbf16>, vector<4x128xbf16>, vector<16x128xf32> -> vector<16x128xf32>
      %15 = arith.addf %7, %14 : vector<16x128xf32>
      %c0_i32_16 = arith.constant 0 : i32
      %16 = arith.addi %6, %c0_i32_16 : i32
      %c0_17 = arith.constant 0 : index
      %c0_18 = arith.constant 0 : index
      %17 = arith.index_cast %16 : i32 to index
      %c1 = arith.constant 1 : index
      %c0_19 = arith.constant 0 : index
      %18 = vector.load %arg2[%c0_17, %c0_18, %17, %c1, %c0_19] : memref<1x1x18x18x4xbf16, #tpu.memory_space<vmem>>, vector<1x1x1x16x4xbf16>
      %19 = vector.shape_cast %18 : vector<1x1x1x16x4xbf16> to vector<16x4xbf16>
      %c1_20 = arith.constant 1 : index
      %c0_21 = arith.constant 0 : index
      %c0_22 = arith.constant 0 : index
      %20 = vector.load %arg5[%c1_20, %c0_21, %c0_22] : memref<27x4x128xbf16, #tpu.memory_space<vmem>>, vector<1x4x128xbf16>
      %21 = vector.shape_cast %20 : vector<1x4x128xbf16> to vector<4x128xbf16>
      %cst_23 = arith.constant dense<0.000000e+00> : vector<16x128xf32>
      %22 = tpu.matmul %19, %21, %cst_23 {dimension_numbers = #tpu.dot_dimension_numbers<[1], [0], [0], [1], [0, 0, 1, 1], [], []>} : vector<16x4xbf16>, vector<4x128xbf16>, vector<16x128xf32> -> vector<16x128xf32>
      %23 = arith.addf %15, %22 : vector<16x128xf32>
      %c0_i32_24 = arith.constant 0 : i32
      %24 = arith.addi %6, %c0_i32_24 : i32
      %c0_25 = arith.constant 0 : index
      %c0_26 = arith.constant 0 : index
      %25 = arith.index_cast %24 : i32 to index
      %c2 = arith.constant 2 : index
      %c0_27 = arith.constant 0 : index
      %26 = vector.load %arg2[%c0_25, %c0_26, %25, %c2, %c0_27] : memref<1x1x18x18x4xbf16, #tpu.memory_space<vmem>>, vector<1x1x1x16x4xbf16>
      %27 = vector.shape_cast %26 : vector<1x1x1x16x4xbf16> to vector<16x4xbf16>
      %c2_28 = arith.constant 2 : index
      %c0_29 = arith.constant 0 : index
      %c0_30 = arith.constant 0 : index
      %28 = vector.load %arg5[%c2_28, %c0_29, %c0_30] : memref<27x4x128xbf16, #tpu.memory_space<vmem>>, vector<1x4x128xbf16>
      %29 = vector.shape_cast %28 : vector<1x4x128xbf16> to vector<4x128xbf16>
      %cst_31 = arith.constant dense<0.000000e+00> : vector<16x128xf32>
      %30 = tpu.matmul %27, %29, %cst_31 {dimension_numbers = #tpu.dot_dimension_numbers<[1], [0], [0], [1], [0, 0, 1, 1], [], []>} : vector<16x4xbf16>, vector<4x128xbf16>, vector<16x128xf32> -> vector<16x128xf32>
      %31 = arith.addf %23, %30 : vector<16x128xf32>
      %c1_i32_32 = arith.constant 1 : i32
      %32 = arith.addi %6, %c1_i32_32 : i32
      %c0_33 = arith.constant 0 : index
      %c0_34 = arith.constant 0 : index
      %33 = arith.index_cast %32 : i32 to index
      %c0_35 = arith.constant 0 : index
      %c0_36 = arith.constant 0 : index
      %34 = vector.load %arg2[%c0_33, %c0_34, %33, %c0_35, %c0_36] : memref<1x1x18x18x4xbf16, #tpu.memory_space<vmem>>, vector<1x1x1x16x4xbf16>
      %35 = vector.shape_cast %34 : vector<1x1x1x16x4xbf16> to vector<16x4xbf16>
      %c3 = arith.constant 3 : index
      %c0_37 = arith.constant 0 : index
      %c0_38 = arith.constant 0 : index
      %36 = vector.load %arg5[%c3, %c0_37, %c0_38] : memref<27x4x128xbf16, #tpu.memory_space<vmem>>, vector<1x4x128xbf16>
      %37 = vector.shape_cast %36 : vector<1x4x128xbf16> to vector<4x128xbf16>
      %cst_39 = arith.constant dense<0.000000e+00> : vector<16x128xf32>
      %38 = tpu.matmul %35, %37, %cst_39 {dimension_numbers = #tpu.dot_dimension_numbers<[1], [0], [0], [1], [0, 0, 1, 1], [], []>} : vector<16x4xbf16>, vector<4x128xbf16>, vector<16x128xf32> -> vector<16x128xf32>
      %39 = arith.addf %31, %38 : vector<16x128xf32>
      %c1_i32_40 = arith.constant 1 : i32
      %40 = arith.addi %6, %c1_i32_40 : i32
      %c0_41 = arith.constant 0 : index
      %c0_42 = arith.constant 0 : index
      %41 = arith.index_cast %40 : i32 to index
      %c1_43 = arith.constant 1 : index
      %c0_44 = arith.constant 0 : index
      %42 = vector.load %arg2[%c0_41, %c0_42, %41, %c1_43, %c0_44] : memref<1x1x18x18x4xbf16, #tpu.memory_space<vmem>>, vector<1x1x1x16x4xbf16>
      %43 = vector.shape_cast %42 : vector<1x1x1x16x4xbf16> to vector<16x4xbf16>
      %c4 = arith.constant 4 : index
      %c0_45 = arith.constant 0 : index
      %c0_46 = arith.constant 0 : index
      %44 = vector.load %arg5[%c4, %c0_45, %c0_46] : memref<27x4x128xbf16, #tpu.memory_space<vmem>>, vector<1x4x128xbf16>
      %45 = vector.shape_cast %44 : vector<1x4x128xbf16> to vector<4x128xbf16>
      %cst_47 = arith.constant dense<0.000000e+00> : vector<16x128xf32>
      %46 = tpu.matmul %43, %45, %cst_47 {dimension_numbers = #tpu.dot_dimension_numbers<[1], [0], [0], [1], [0, 0, 1, 1], [], []>} : vector<16x4xbf16>, vector<4x128xbf16>, vector<16x128xf32> -> vector<16x128xf32>
      %47 = arith.addf %39, %46 : vector<16x128xf32>
      %c1_i32_48 = arith.constant 1 : i32
      %48 = arith.addi %6, %c1_i32_48 : i32
      %c0_49 = arith.constant 0 : index
      %c0_50 = arith.constant 0 : index
      %49 = arith.index_cast %48 : i32 to index
      %c2_51 = arith.constant 2 : index
      %c0_52 = arith.constant 0 : index
      %50 = vector.load %arg2[%c0_49, %c0_50, %49, %c2_51, %c0_52] : memref<1x1x18x18x4xbf16, #tpu.memory_space<vmem>>, vector<1x1x1x16x4xbf16>
      %51 = vector.shape_cast %50 : vector<1x1x1x16x4xbf16> to vector<16x4xbf16>
      %c5 = arith.constant 5 : index
      %c0_53 = arith.constant 0 : index
      %c0_54 = arith.constant 0 : index
      %52 = vector.load %arg5[%c5, %c0_53, %c0_54] : memref<27x4x128xbf16, #tpu.memory_space<vmem>>, vector<1x4x128xbf16>
      %53 = vector.shape_cast %52 : vector<1x4x128xbf16> to vector<4x128xbf16>
      %cst_55 = arith.constant dense<0.000000e+00> : vector<16x128xf32>
      %54 = tpu.matmul %51, %53, %cst_55 {dimension_numbers = #tpu.dot_dimension_numbers<[1], [0], [0], [1], [0, 0, 1, 1], [], []>} : vector<16x4xbf16>, vector<4x128xbf16>, vector<16x128xf32> -> vector<16x128xf32>
      %55 = arith.addf %47, %54 : vector<16x128xf32>
      %c2_i32 = arith.constant 2 : i32
      %56 = arith.addi %6, %c2_i32 : i32
      %c0_56 = arith.constant 0 : index
      %c0_57 = arith.constant 0 : index
      %57 = arith.index_cast %56 : i32 to index
      %c0_58 = arith.constant 0 : index
      %c0_59 = arith.constant 0 : index
      %58 = vector.load %arg2[%c0_56, %c0_57, %57, %c0_58, %c0_59] : memref<1x1x18x18x4xbf16, #tpu.memory_space<vmem>>, vector<1x1x1x16x4xbf16>
      %59 = vector.shape_cast %58 : vector<1x1x1x16x4xbf16> to vector<16x4xbf16>
      %c6 = arith.constant 6 : index
      %c0_60 = arith.constant 0 : index
      %c0_61 = arith.constant 0 : index
      %60 = vector.load %arg5[%c6, %c0_60, %c0_61] : memref<27x4x128xbf16, #tpu.memory_space<vmem>>, vector<1x4x128xbf16>
      %61 = vector.shape_cast %60 : vector<1x4x128xbf16> to vector<4x128xbf16>
      %cst_62 = arith.constant dense<0.000000e+00> : vector<16x128xf32>
      %62 = tpu.matmul %59, %61, %cst_62 {dimension_numbers = #tpu.dot_dimension_numbers<[1], [0], [0], [1], [0, 0, 1, 1], [], []>} : vector<16x4xbf16>, vector<4x128xbf16>, vector<16x128xf32> -> vector<16x128xf32>
      %63 = arith.addf %55, %62 : vector<16x128xf32>
      %c2_i32_63 = arith.constant 2 : i32
      %64 = arith.addi %6, %c2_i32_63 : i32
      %c0_64 = arith.constant 0 : index
      %c0_65 = arith.constant 0 : index
      %65 = arith.index_cast %64 : i32 to index
      %c1_66 = arith.constant 1 : index
      %c0_67 = arith.constant 0 : index
      %66 = vector.load %arg2[%c0_64, %c0_65, %65, %c1_66, %c0_67] : memref<1x1x18x18x4xbf16, #tpu.memory_space<vmem>>, vector<1x1x1x16x4xbf16>
      %67 = vector.shape_cast %66 : vector<1x1x1x16x4xbf16> to vector<16x4xbf16>
      %c7 = arith.constant 7 : index
      %c0_68 = arith.constant 0 : index
      %c0_69 = arith.constant 0 : index
      %68 = vector.load %arg5[%c7, %c0_68, %c0_69] : memref<27x4x128xbf16, #tpu.memory_space<vmem>>, vector<1x4x128xbf16>
      %69 = vector.shape_cast %68 : vector<1x4x128xbf16> to vector<4x128xbf16>
      %cst_70 = arith.constant dense<0.000000e+00> : vector<16x128xf32>
      %70 = tpu.matmul %67, %69, %cst_70 {dimension_numbers = #tpu.dot_dimension_numbers<[1], [0], [0], [1], [0, 0, 1, 1], [], []>} : vector<16x4xbf16>, vector<4x128xbf16>, vector<16x128xf32> -> vector<16x128xf32>
      %71 = arith.addf %63, %70 : vector<16x128xf32>
      %c2_i32_71 = arith.constant 2 : i32
      %72 = arith.addi %6, %c2_i32_71 : i32
      %c0_72 = arith.constant 0 : index
      %c0_73 = arith.constant 0 : index
      %73 = arith.index_cast %72 : i32 to index
      %c2_74 = arith.constant 2 : index
      %c0_75 = arith.constant 0 : index
      %74 = vector.load %arg2[%c0_72, %c0_73, %73, %c2_74, %c0_75] : memref<1x1x18x18x4xbf16, #tpu.memory_space<vmem>>, vector<1x1x1x16x4xbf16>
      %75 = vector.shape_cast %74 : vector<1x1x1x16x4xbf16> to vector<16x4xbf16>
      %c8 = arith.constant 8 : index
      %c0_76 = arith.constant 0 : index
      %c0_77 = arith.constant 0 : index
      %76 = vector.load %arg5[%c8, %c0_76, %c0_77] : memref<27x4x128xbf16, #tpu.memory_space<vmem>>, vector<1x4x128xbf16>
      %77 = vector.shape_cast %76 : vector<1x4x128xbf16> to vector<4x128xbf16>
      %cst_78 = arith.constant dense<0.000000e+00> : vector<16x128xf32>
      %78 = tpu.matmul %75, %77, %cst_78 {dimension_numbers = #tpu.dot_dimension_numbers<[1], [0], [0], [1], [0, 0, 1, 1], [], []>} : vector<16x4xbf16>, vector<4x128xbf16>, vector<16x128xf32> -> vector<16x128xf32>
      %79 = arith.addf %71, %78 : vector<16x128xf32>
      %c0_i32_79 = arith.constant 0 : i32
      %80 = arith.addi %6, %c0_i32_79 : i32
      %c0_80 = arith.constant 0 : index
      %c0_81 = arith.constant 0 : index
      %81 = arith.index_cast %80 : i32 to index
      %c0_82 = arith.constant 0 : index
      %c0_83 = arith.constant 0 : index
      %82 = vector.load %arg3[%c0_80, %c0_81, %81, %c0_82, %c0_83] : memref<1x1x18x18x4xbf16, #tpu.memory_space<vmem>>, vector<1x1x1x16x4xbf16>
      %83 = vector.shape_cast %82 : vector<1x1x1x16x4xbf16> to vector<16x4xbf16>
      %c9 = arith.constant 9 : index
      %c0_84 = arith.constant 0 : index
      %c0_85 = arith.constant 0 : index
      %84 = vector.load %arg5[%c9, %c0_84, %c0_85] : memref<27x4x128xbf16, #tpu.memory_space<vmem>>, vector<1x4x128xbf16>
      %85 = vector.shape_cast %84 : vector<1x4x128xbf16> to vector<4x128xbf16>
      %cst_86 = arith.constant dense<0.000000e+00> : vector<16x128xf32>
      %86 = tpu.matmul %83, %85, %cst_86 {dimension_numbers = #tpu.dot_dimension_numbers<[1], [0], [0], [1], [0, 0, 1, 1], [], []>} : vector<16x4xbf16>, vector<4x128xbf16>, vector<16x128xf32> -> vector<16x128xf32>
      %87 = arith.addf %79, %86 : vector<16x128xf32>
      %c0_i32_87 = arith.constant 0 : i32
      %88 = arith.addi %6, %c0_i32_87 : i32
      %c0_88 = arith.constant 0 : index
      %c0_89 = arith.constant 0 : index
      %89 = arith.index_cast %88 : i32 to index
      %c1_90 = arith.constant 1 : index
      %c0_91 = arith.constant 0 : index
      %90 = vector.load %arg3[%c0_88, %c0_89, %89, %c1_90, %c0_91] : memref<1x1x18x18x4xbf16, #tpu.memory_space<vmem>>, vector<1x1x1x16x4xbf16>
      %91 = vector.shape_cast %90 : vector<1x1x1x16x4xbf16> to vector<16x4xbf16>
      %c10 = arith.constant 10 : index
      %c0_92 = arith.constant 0 : index
      %c0_93 = arith.constant 0 : index
      %92 = vector.load %arg5[%c10, %c0_92, %c0_93] : memref<27x4x128xbf16, #tpu.memory_space<vmem>>, vector<1x4x128xbf16>
      %93 = vector.shape_cast %92 : vector<1x4x128xbf16> to vector<4x128xbf16>
      %cst_94 = arith.constant dense<0.000000e+00> : vector<16x128xf32>
      %94 = tpu.matmul %91, %93, %cst_94 {dimension_numbers = #tpu.dot_dimension_numbers<[1], [0], [0], [1], [0, 0, 1, 1], [], []>} : vector<16x4xbf16>, vector<4x128xbf16>, vector<16x128xf32> -> vector<16x128xf32>
      %95 = arith.addf %87, %94 : vector<16x128xf32>
      %c0_i32_95 = arith.constant 0 : i32
      %96 = arith.addi %6, %c0_i32_95 : i32
      %c0_96 = arith.constant 0 : index
      %c0_97 = arith.constant 0 : index
      %97 = arith.index_cast %96 : i32 to index
      %c2_98 = arith.constant 2 : index
      %c0_99 = arith.constant 0 : index
      %98 = vector.load %arg3[%c0_96, %c0_97, %97, %c2_98, %c0_99] : memref<1x1x18x18x4xbf16, #tpu.memory_space<vmem>>, vector<1x1x1x16x4xbf16>
      %99 = vector.shape_cast %98 : vector<1x1x1x16x4xbf16> to vector<16x4xbf16>
      %c11 = arith.constant 11 : index
      %c0_100 = arith.constant 0 : index
      %c0_101 = arith.constant 0 : index
      %100 = vector.load %arg5[%c11, %c0_100, %c0_101] : memref<27x4x128xbf16, #tpu.memory_space<vmem>>, vector<1x4x128xbf16>
      %101 = vector.shape_cast %100 : vector<1x4x128xbf16> to vector<4x128xbf16>
      %cst_102 = arith.constant dense<0.000000e+00> : vector<16x128xf32>
      %102 = tpu.matmul %99, %101, %cst_102 {dimension_numbers = #tpu.dot_dimension_numbers<[1], [0], [0], [1], [0, 0, 1, 1], [], []>} : vector<16x4xbf16>, vector<4x128xbf16>, vector<16x128xf32> -> vector<16x128xf32>
      %103 = arith.addf %95, %102 : vector<16x128xf32>
      %c1_i32_103 = arith.constant 1 : i32
      %104 = arith.addi %6, %c1_i32_103 : i32
      %c0_104 = arith.constant 0 : index
      %c0_105 = arith.constant 0 : index
      %105 = arith.index_cast %104 : i32 to index
      %c0_106 = arith.constant 0 : index
      %c0_107 = arith.constant 0 : index
      %106 = vector.load %arg3[%c0_104, %c0_105, %105, %c0_106, %c0_107] : memref<1x1x18x18x4xbf16, #tpu.memory_space<vmem>>, vector<1x1x1x16x4xbf16>
      %107 = vector.shape_cast %106 : vector<1x1x1x16x4xbf16> to vector<16x4xbf16>
      %c12 = arith.constant 12 : index
      %c0_108 = arith.constant 0 : index
      %c0_109 = arith.constant 0 : index
      %108 = vector.load %arg5[%c12, %c0_108, %c0_109] : memref<27x4x128xbf16, #tpu.memory_space<vmem>>, vector<1x4x128xbf16>
      %109 = vector.shape_cast %108 : vector<1x4x128xbf16> to vector<4x128xbf16>
      %cst_110 = arith.constant dense<0.000000e+00> : vector<16x128xf32>
      %110 = tpu.matmul %107, %109, %cst_110 {dimension_numbers = #tpu.dot_dimension_numbers<[1], [0], [0], [1], [0, 0, 1, 1], [], []>} : vector<16x4xbf16>, vector<4x128xbf16>, vector<16x128xf32> -> vector<16x128xf32>
      %111 = arith.addf %103, %110 : vector<16x128xf32>
      %c1_i32_111 = arith.constant 1 : i32
      %112 = arith.addi %6, %c1_i32_111 : i32
      %c0_112 = arith.constant 0 : index
      %c0_113 = arith.constant 0 : index
      %113 = arith.index_cast %112 : i32 to index
      %c1_114 = arith.constant 1 : index
      %c0_115 = arith.constant 0 : index
      %114 = vector.load %arg3[%c0_112, %c0_113, %113, %c1_114, %c0_115] : memref<1x1x18x18x4xbf16, #tpu.memory_space<vmem>>, vector<1x1x1x16x4xbf16>
      %115 = vector.shape_cast %114 : vector<1x1x1x16x4xbf16> to vector<16x4xbf16>
      %c13 = arith.constant 13 : index
      %c0_116 = arith.constant 0 : index
      %c0_117 = arith.constant 0 : index
      %116 = vector.load %arg5[%c13, %c0_116, %c0_117] : memref<27x4x128xbf16, #tpu.memory_space<vmem>>, vector<1x4x128xbf16>
      %117 = vector.shape_cast %116 : vector<1x4x128xbf16> to vector<4x128xbf16>
      %cst_118 = arith.constant dense<0.000000e+00> : vector<16x128xf32>
      %118 = tpu.matmul %115, %117, %cst_118 {dimension_numbers = #tpu.dot_dimension_numbers<[1], [0], [0], [1], [0, 0, 1, 1], [], []>} : vector<16x4xbf16>, vector<4x128xbf16>, vector<16x128xf32> -> vector<16x128xf32>
      %119 = arith.addf %111, %118 : vector<16x128xf32>
      %c1_i32_119 = arith.constant 1 : i32
      %120 = arith.addi %6, %c1_i32_119 : i32
      %c0_120 = arith.constant 0 : index
      %c0_121 = arith.constant 0 : index
      %121 = arith.index_cast %120 : i32 to index
      %c2_122 = arith.constant 2 : index
      %c0_123 = arith.constant 0 : index
      %122 = vector.load %arg3[%c0_120, %c0_121, %121, %c2_122, %c0_123] : memref<1x1x18x18x4xbf16, #tpu.memory_space<vmem>>, vector<1x1x1x16x4xbf16>
      %123 = vector.shape_cast %122 : vector<1x1x1x16x4xbf16> to vector<16x4xbf16>
      %c14 = arith.constant 14 : index
      %c0_124 = arith.constant 0 : index
      %c0_125 = arith.constant 0 : index
      %124 = vector.load %arg5[%c14, %c0_124, %c0_125] : memref<27x4x128xbf16, #tpu.memory_space<vmem>>, vector<1x4x128xbf16>
      %125 = vector.shape_cast %124 : vector<1x4x128xbf16> to vector<4x128xbf16>
      %cst_126 = arith.constant dense<0.000000e+00> : vector<16x128xf32>
      %126 = tpu.matmul %123, %125, %cst_126 {dimension_numbers = #tpu.dot_dimension_numbers<[1], [0], [0], [1], [0, 0, 1, 1], [], []>} : vector<16x4xbf16>, vector<4x128xbf16>, vector<16x128xf32> -> vector<16x128xf32>
      %127 = arith.addf %119, %126 : vector<16x128xf32>
      %c2_i32_127 = arith.constant 2 : i32
      %128 = arith.addi %6, %c2_i32_127 : i32
      %c0_128 = arith.constant 0 : index
      %c0_129 = arith.constant 0 : index
      %129 = arith.index_cast %128 : i32 to index
      %c0_130 = arith.constant 0 : index
      %c0_131 = arith.constant 0 : index
      %130 = vector.load %arg3[%c0_128, %c0_129, %129, %c0_130, %c0_131] : memref<1x1x18x18x4xbf16, #tpu.memory_space<vmem>>, vector<1x1x1x16x4xbf16>
      %131 = vector.shape_cast %130 : vector<1x1x1x16x4xbf16> to vector<16x4xbf16>
      %c15 = arith.constant 15 : index
      %c0_132 = arith.constant 0 : index
      %c0_133 = arith.constant 0 : index
      %132 = vector.load %arg5[%c15, %c0_132, %c0_133] : memref<27x4x128xbf16, #tpu.memory_space<vmem>>, vector<1x4x128xbf16>
      %133 = vector.shape_cast %132 : vector<1x4x128xbf16> to vector<4x128xbf16>
      %cst_134 = arith.constant dense<0.000000e+00> : vector<16x128xf32>
      %134 = tpu.matmul %131, %133, %cst_134 {dimension_numbers = #tpu.dot_dimension_numbers<[1], [0], [0], [1], [0, 0, 1, 1], [], []>} : vector<16x4xbf16>, vector<4x128xbf16>, vector<16x128xf32> -> vector<16x128xf32>
      %135 = arith.addf %127, %134 : vector<16x128xf32>
      %c2_i32_135 = arith.constant 2 : i32
      %136 = arith.addi %6, %c2_i32_135 : i32
      %c0_136 = arith.constant 0 : index
      %c0_137 = arith.constant 0 : index
      %137 = arith.index_cast %136 : i32 to index
      %c1_138 = arith.constant 1 : index
      %c0_139 = arith.constant 0 : index
      %138 = vector.load %arg3[%c0_136, %c0_137, %137, %c1_138, %c0_139] : memref<1x1x18x18x4xbf16, #tpu.memory_space<vmem>>, vector<1x1x1x16x4xbf16>
      %139 = vector.shape_cast %138 : vector<1x1x1x16x4xbf16> to vector<16x4xbf16>
      %c16 = arith.constant 16 : index
      %c0_140 = arith.constant 0 : index
      %c0_141 = arith.constant 0 : index
      %140 = vector.load %arg5[%c16, %c0_140, %c0_141] : memref<27x4x128xbf16, #tpu.memory_space<vmem>>, vector<1x4x128xbf16>
      %141 = vector.shape_cast %140 : vector<1x4x128xbf16> to vector<4x128xbf16>
      %cst_142 = arith.constant dense<0.000000e+00> : vector<16x128xf32>
      %142 = tpu.matmul %139, %141, %cst_142 {dimension_numbers = #tpu.dot_dimension_numbers<[1], [0], [0], [1], [0, 0, 1, 1], [], []>} : vector<16x4xbf16>, vector<4x128xbf16>, vector<16x128xf32> -> vector<16x128xf32>
      %143 = arith.addf %135, %142 : vector<16x128xf32>
      %c2_i32_143 = arith.constant 2 : i32
      %144 = arith.addi %6, %c2_i32_143 : i32
      %c0_144 = arith.constant 0 : index
      %c0_145 = arith.constant 0 : index
      %145 = arith.index_cast %144 : i32 to index
      %c2_146 = arith.constant 2 : index
      %c0_147 = arith.constant 0 : index
      %146 = vector.load %arg3[%c0_144, %c0_145, %145, %c2_146, %c0_147] : memref<1x1x18x18x4xbf16, #tpu.memory_space<vmem>>, vector<1x1x1x16x4xbf16>
      %147 = vector.shape_cast %146 : vector<1x1x1x16x4xbf16> to vector<16x4xbf16>
      %c17 = arith.constant 17 : index
      %c0_148 = arith.constant 0 : index
      %c0_149 = arith.constant 0 : index
      %148 = vector.load %arg5[%c17, %c0_148, %c0_149] : memref<27x4x128xbf16, #tpu.memory_space<vmem>>, vector<1x4x128xbf16>
      %149 = vector.shape_cast %148 : vector<1x4x128xbf16> to vector<4x128xbf16>
      %cst_150 = arith.constant dense<0.000000e+00> : vector<16x128xf32>
      %150 = tpu.matmul %147, %149, %cst_150 {dimension_numbers = #tpu.dot_dimension_numbers<[1], [0], [0], [1], [0, 0, 1, 1], [], []>} : vector<16x4xbf16>, vector<4x128xbf16>, vector<16x128xf32> -> vector<16x128xf32>
      %151 = arith.addf %143, %150 : vector<16x128xf32>
      %c0_i32_151 = arith.constant 0 : i32
      %152 = arith.addi %6, %c0_i32_151 : i32
      %c0_152 = arith.constant 0 : index
      %c0_153 = arith.constant 0 : index
      %153 = arith.index_cast %152 : i32 to index
      %c0_154 = arith.constant 0 : index
      %c0_155 = arith.constant 0 : index
      %154 = vector.load %arg4[%c0_152, %c0_153, %153, %c0_154, %c0_155] : memref<1x1x18x18x4xbf16, #tpu.memory_space<vmem>>, vector<1x1x1x16x4xbf16>
      %155 = vector.shape_cast %154 : vector<1x1x1x16x4xbf16> to vector<16x4xbf16>
      %c18 = arith.constant 18 : index
      %c0_156 = arith.constant 0 : index
      %c0_157 = arith.constant 0 : index
      %156 = vector.load %arg5[%c18, %c0_156, %c0_157] : memref<27x4x128xbf16, #tpu.memory_space<vmem>>, vector<1x4x128xbf16>
      %157 = vector.shape_cast %156 : vector<1x4x128xbf16> to vector<4x128xbf16>
      %cst_158 = arith.constant dense<0.000000e+00> : vector<16x128xf32>
      %158 = tpu.matmul %155, %157, %cst_158 {dimension_numbers = #tpu.dot_dimension_numbers<[1], [0], [0], [1], [0, 0, 1, 1], [], []>} : vector<16x4xbf16>, vector<4x128xbf16>, vector<16x128xf32> -> vector<16x128xf32>
      %159 = arith.addf %151, %158 : vector<16x128xf32>
      %c0_i32_159 = arith.constant 0 : i32
      %160 = arith.addi %6, %c0_i32_159 : i32
      %c0_160 = arith.constant 0 : index
      %c0_161 = arith.constant 0 : index
      %161 = arith.index_cast %160 : i32 to index
      %c1_162 = arith.constant 1 : index
      %c0_163 = arith.constant 0 : index
      %162 = vector.load %arg4[%c0_160, %c0_161, %161, %c1_162, %c0_163] : memref<1x1x18x18x4xbf16, #tpu.memory_space<vmem>>, vector<1x1x1x16x4xbf16>
      %163 = vector.shape_cast %162 : vector<1x1x1x16x4xbf16> to vector<16x4xbf16>
      %c19 = arith.constant 19 : index
      %c0_164 = arith.constant 0 : index
      %c0_165 = arith.constant 0 : index
      %164 = vector.load %arg5[%c19, %c0_164, %c0_165] : memref<27x4x128xbf16, #tpu.memory_space<vmem>>, vector<1x4x128xbf16>
      %165 = vector.shape_cast %164 : vector<1x4x128xbf16> to vector<4x128xbf16>
      %cst_166 = arith.constant dense<0.000000e+00> : vector<16x128xf32>
      %166 = tpu.matmul %163, %165, %cst_166 {dimension_numbers = #tpu.dot_dimension_numbers<[1], [0], [0], [1], [0, 0, 1, 1], [], []>} : vector<16x4xbf16>, vector<4x128xbf16>, vector<16x128xf32> -> vector<16x128xf32>
      %167 = arith.addf %159, %166 : vector<16x128xf32>
      %c0_i32_167 = arith.constant 0 : i32
      %168 = arith.addi %6, %c0_i32_167 : i32
      %c0_168 = arith.constant 0 : index
      %c0_169 = arith.constant 0 : index
      %169 = arith.index_cast %168 : i32 to index
      %c2_170 = arith.constant 2 : index
      %c0_171 = arith.constant 0 : index
      %170 = vector.load %arg4[%c0_168, %c0_169, %169, %c2_170, %c0_171] : memref<1x1x18x18x4xbf16, #tpu.memory_space<vmem>>, vector<1x1x1x16x4xbf16>
      %171 = vector.shape_cast %170 : vector<1x1x1x16x4xbf16> to vector<16x4xbf16>
      %c20 = arith.constant 20 : index
      %c0_172 = arith.constant 0 : index
      %c0_173 = arith.constant 0 : index
      %172 = vector.load %arg5[%c20, %c0_172, %c0_173] : memref<27x4x128xbf16, #tpu.memory_space<vmem>>, vector<1x4x128xbf16>
      %173 = vector.shape_cast %172 : vector<1x4x128xbf16> to vector<4x128xbf16>
      %cst_174 = arith.constant dense<0.000000e+00> : vector<16x128xf32>
      %174 = tpu.matmul %171, %173, %cst_174 {dimension_numbers = #tpu.dot_dimension_numbers<[1], [0], [0], [1], [0, 0, 1, 1], [], []>} : vector<16x4xbf16>, vector<4x128xbf16>, vector<16x128xf32> -> vector<16x128xf32>
      %175 = arith.addf %167, %174 : vector<16x128xf32>
      %c1_i32_175 = arith.constant 1 : i32
      %176 = arith.addi %6, %c1_i32_175 : i32
      %c0_176 = arith.constant 0 : index
      %c0_177 = arith.constant 0 : index
      %177 = arith.index_cast %176 : i32 to index
      %c0_178 = arith.constant 0 : index
      %c0_179 = arith.constant 0 : index
      %178 = vector.load %arg4[%c0_176, %c0_177, %177, %c0_178, %c0_179] : memref<1x1x18x18x4xbf16, #tpu.memory_space<vmem>>, vector<1x1x1x16x4xbf16>
      %179 = vector.shape_cast %178 : vector<1x1x1x16x4xbf16> to vector<16x4xbf16>
      %c21 = arith.constant 21 : index
      %c0_180 = arith.constant 0 : index
      %c0_181 = arith.constant 0 : index
      %180 = vector.load %arg5[%c21, %c0_180, %c0_181] : memref<27x4x128xbf16, #tpu.memory_space<vmem>>, vector<1x4x128xbf16>
      %181 = vector.shape_cast %180 : vector<1x4x128xbf16> to vector<4x128xbf16>
      %cst_182 = arith.constant dense<0.000000e+00> : vector<16x128xf32>
      %182 = tpu.matmul %179, %181, %cst_182 {dimension_numbers = #tpu.dot_dimension_numbers<[1], [0], [0], [1], [0, 0, 1, 1], [], []>} : vector<16x4xbf16>, vector<4x128xbf16>, vector<16x128xf32> -> vector<16x128xf32>
      %183 = arith.addf %175, %182 : vector<16x128xf32>
      %c1_i32_183 = arith.constant 1 : i32
      %184 = arith.addi %6, %c1_i32_183 : i32
      %c0_184 = arith.constant 0 : index
      %c0_185 = arith.constant 0 : index
      %185 = arith.index_cast %184 : i32 to index
      %c1_186 = arith.constant 1 : index
      %c0_187 = arith.constant 0 : index
      %186 = vector.load %arg4[%c0_184, %c0_185, %185, %c1_186, %c0_187] : memref<1x1x18x18x4xbf16, #tpu.memory_space<vmem>>, vector<1x1x1x16x4xbf16>
      %187 = vector.shape_cast %186 : vector<1x1x1x16x4xbf16> to vector<16x4xbf16>
      %c22 = arith.constant 22 : index
      %c0_188 = arith.constant 0 : index
      %c0_189 = arith.constant 0 : index
      %188 = vector.load %arg5[%c22, %c0_188, %c0_189] : memref<27x4x128xbf16, #tpu.memory_space<vmem>>, vector<1x4x128xbf16>
      %189 = vector.shape_cast %188 : vector<1x4x128xbf16> to vector<4x128xbf16>
      %cst_190 = arith.constant dense<0.000000e+00> : vector<16x128xf32>
      %190 = tpu.matmul %187, %189, %cst_190 {dimension_numbers = #tpu.dot_dimension_numbers<[1], [0], [0], [1], [0, 0, 1, 1], [], []>} : vector<16x4xbf16>, vector<4x128xbf16>, vector<16x128xf32> -> vector<16x128xf32>
      %191 = arith.addf %183, %190 : vector<16x128xf32>
      %c1_i32_191 = arith.constant 1 : i32
      %192 = arith.addi %6, %c1_i32_191 : i32
      %c0_192 = arith.constant 0 : index
      %c0_193 = arith.constant 0 : index
      %193 = arith.index_cast %192 : i32 to index
      %c2_194 = arith.constant 2 : index
      %c0_195 = arith.constant 0 : index
      %194 = vector.load %arg4[%c0_192, %c0_193, %193, %c2_194, %c0_195] : memref<1x1x18x18x4xbf16, #tpu.memory_space<vmem>>, vector<1x1x1x16x4xbf16>
      %195 = vector.shape_cast %194 : vector<1x1x1x16x4xbf16> to vector<16x4xbf16>
      %c23 = arith.constant 23 : index
      %c0_196 = arith.constant 0 : index
      %c0_197 = arith.constant 0 : index
      %196 = vector.load %arg5[%c23, %c0_196, %c0_197] : memref<27x4x128xbf16, #tpu.memory_space<vmem>>, vector<1x4x128xbf16>
      %197 = vector.shape_cast %196 : vector<1x4x128xbf16> to vector<4x128xbf16>
      %cst_198 = arith.constant dense<0.000000e+00> : vector<16x128xf32>
      %198 = tpu.matmul %195, %197, %cst_198 {dimension_numbers = #tpu.dot_dimension_numbers<[1], [0], [0], [1], [0, 0, 1, 1], [], []>} : vector<16x4xbf16>, vector<4x128xbf16>, vector<16x128xf32> -> vector<16x128xf32>
      %199 = arith.addf %191, %198 : vector<16x128xf32>
      %c2_i32_199 = arith.constant 2 : i32
      %200 = arith.addi %6, %c2_i32_199 : i32
      %c0_200 = arith.constant 0 : index
      %c0_201 = arith.constant 0 : index
      %201 = arith.index_cast %200 : i32 to index
      %c0_202 = arith.constant 0 : index
      %c0_203 = arith.constant 0 : index
      %202 = vector.load %arg4[%c0_200, %c0_201, %201, %c0_202, %c0_203] : memref<1x1x18x18x4xbf16, #tpu.memory_space<vmem>>, vector<1x1x1x16x4xbf16>
      %203 = vector.shape_cast %202 : vector<1x1x1x16x4xbf16> to vector<16x4xbf16>
      %c24 = arith.constant 24 : index
      %c0_204 = arith.constant 0 : index
      %c0_205 = arith.constant 0 : index
      %204 = vector.load %arg5[%c24, %c0_204, %c0_205] : memref<27x4x128xbf16, #tpu.memory_space<vmem>>, vector<1x4x128xbf16>
      %205 = vector.shape_cast %204 : vector<1x4x128xbf16> to vector<4x128xbf16>
      %cst_206 = arith.constant dense<0.000000e+00> : vector<16x128xf32>
      %206 = tpu.matmul %203, %205, %cst_206 {dimension_numbers = #tpu.dot_dimension_numbers<[1], [0], [0], [1], [0, 0, 1, 1], [], []>} : vector<16x4xbf16>, vector<4x128xbf16>, vector<16x128xf32> -> vector<16x128xf32>
      %207 = arith.addf %199, %206 : vector<16x128xf32>
      %c2_i32_207 = arith.constant 2 : i32
      %208 = arith.addi %6, %c2_i32_207 : i32
      %c0_208 = arith.constant 0 : index
      %c0_209 = arith.constant 0 : index
      %209 = arith.index_cast %208 : i32 to index
      %c1_210 = arith.constant 1 : index
      %c0_211 = arith.constant 0 : index
      %210 = vector.load %arg4[%c0_208, %c0_209, %209, %c1_210, %c0_211] : memref<1x1x18x18x4xbf16, #tpu.memory_space<vmem>>, vector<1x1x1x16x4xbf16>
      %211 = vector.shape_cast %210 : vector<1x1x1x16x4xbf16> to vector<16x4xbf16>
      %c25 = arith.constant 25 : index
      %c0_212 = arith.constant 0 : index
      %c0_213 = arith.constant 0 : index
      %212 = vector.load %arg5[%c25, %c0_212, %c0_213] : memref<27x4x128xbf16, #tpu.memory_space<vmem>>, vector<1x4x128xbf16>
      %213 = vector.shape_cast %212 : vector<1x4x128xbf16> to vector<4x128xbf16>
      %cst_214 = arith.constant dense<0.000000e+00> : vector<16x128xf32>
      %214 = tpu.matmul %211, %213, %cst_214 {dimension_numbers = #tpu.dot_dimension_numbers<[1], [0], [0], [1], [0, 0, 1, 1], [], []>} : vector<16x4xbf16>, vector<4x128xbf16>, vector<16x128xf32> -> vector<16x128xf32>
      %215 = arith.addf %207, %214 : vector<16x128xf32>
      %c2_i32_215 = arith.constant 2 : i32
      %216 = arith.addi %6, %c2_i32_215 : i32
      %c0_216 = arith.constant 0 : index
      %c0_217 = arith.constant 0 : index
      %217 = arith.index_cast %216 : i32 to index
      %c2_218 = arith.constant 2 : index
      %c0_219 = arith.constant 0 : index
      %218 = vector.load %arg4[%c0_216, %c0_217, %217, %c2_218, %c0_219] : memref<1x1x18x18x4xbf16, #tpu.memory_space<vmem>>, vector<1x1x1x16x4xbf16>
      %219 = vector.shape_cast %218 : vector<1x1x1x16x4xbf16> to vector<16x4xbf16>
      %c26 = arith.constant 26 : index
      %c0_220 = arith.constant 0 : index
      %c0_221 = arith.constant 0 : index
      %220 = vector.load %arg5[%c26, %c0_220, %c0_221] : memref<27x4x128xbf16, #tpu.memory_space<vmem>>, vector<1x4x128xbf16>
      %221 = vector.shape_cast %220 : vector<1x4x128xbf16> to vector<4x128xbf16>
      %cst_222 = arith.constant dense<0.000000e+00> : vector<16x128xf32>
      %222 = tpu.matmul %219, %221, %cst_222 {dimension_numbers = #tpu.dot_dimension_numbers<[1], [0], [0], [1], [0, 0, 1, 1], [], []>} : vector<16x4xbf16>, vector<4x128xbf16>, vector<16x128xf32> -> vector<16x128xf32>
      %223 = arith.addf %215, %222 : vector<16x128xf32>
      %c0_223 = arith.constant 0 : index
      %c0_224 = arith.constant 0 : index
      %224 = arith.index_cast %6 : i32 to index
      %c0_225 = arith.constant 0 : index
      %c0_226 = arith.constant 0 : index
      %225 = vector.load %arg6[%c0_223, %c0_224, %224, %c0_225, %c0_226] : memref<1x1x16x16x128xf32, #tpu.memory_space<vmem>>, vector<1x1x1x16x128xf32>
      %226 = vector.shape_cast %225 : vector<1x1x1x16x128xf32> to vector<16x128xf32>
      %227 = vector.shape_cast %223 : vector<16x128xf32> to vector<1x1x1x16x128xf32>
      tpu.vector_store %arg6[%c0_223, %c0_224, %224, %c0_225, %c0_226], %227 {strides = array<i32>} : memref<1x1x16x16x128xf32, #tpu.memory_space<vmem>>, vector<1x1x1x16x128xf32>,
      %c0_227 = arith.constant 0 : index
      %c0_228 = arith.constant 0 : index
      %c0_229 = arith.constant 0 : index
      %c0_230 = arith.constant 0 : index
      %228 = vector.load %arg7[%c0_227, %c0_228, %c0_229, %c0_230] : memref<1x1x2x128xf32, #tpu.memory_space<vmem>>, vector<1x1x1x128xf32>
      %229 = vector.shape_cast %228 : vector<1x1x1x128xf32> to vector<128xf32>
      %cst_231 = arith.constant dense<0.000000e+00> : vector<128xf32>
      %230 = vector.multi_reduction <add>, %223, %cst_231 [0] : vector<16x128xf32> to vector<128xf32>
      %231 = arith.addf %229, %230 : vector<128xf32>
      %c0_232 = arith.constant 0 : index
      %c0_233 = arith.constant 0 : index
      %c0_234 = arith.constant 0 : index
      %c0_235 = arith.constant 0 : index
      %232 = vector.load %arg7[%c0_232, %c0_233, %c0_234, %c0_235] : memref<1x1x2x128xf32, #tpu.memory_space<vmem>>, vector<1x1x1x128xf32>
      %233 = vector.shape_cast %232 : vector<1x1x1x128xf32> to vector<128xf32>
      %234 = vector.shape_cast %231 : vector<128xf32> to vector<1x1x1x128xf32>
      tpu.vector_store %arg7[%c0_232, %c0_233, %c0_234, %c0_235], %234 {strides = array<i32>} : memref<1x1x2x128xf32, #tpu.memory_space<vmem>>, vector<1x1x1x128xf32>,
      %c0_236 = arith.constant 0 : index
      %c0_237 = arith.constant 0 : index
      %c1_238 = arith.constant 1 : index
      %c0_239 = arith.constant 0 : index
      %235 = vector.load %arg7[%c0_236, %c0_237, %c1_238, %c0_239] : memref<1x1x2x128xf32, #tpu.memory_space<vmem>>, vector<1x1x1x128xf32>
      %236 = vector.shape_cast %235 : vector<1x1x1x128xf32> to vector<128xf32>
      %237 = arith.mulf %223, %223 : vector<16x128xf32>
      %cst_240 = arith.constant dense<0.000000e+00> : vector<128xf32>
      %238 = vector.multi_reduction <add>, %237, %cst_240 [0] : vector<16x128xf32> to vector<128xf32>
      %239 = arith.addf %236, %238 : vector<128xf32>
      %c0_241 = arith.constant 0 : index
      %c0_242 = arith.constant 0 : index
      %c1_243 = arith.constant 1 : index
      %c0_244 = arith.constant 0 : index
      %240 = vector.load %arg7[%c0_241, %c0_242, %c1_243, %c0_244] : memref<1x1x2x128xf32, #tpu.memory_space<vmem>>, vector<1x1x1x128xf32>
      %241 = vector.shape_cast %240 : vector<1x1x1x128xf32> to vector<128xf32>
      %242 = vector.shape_cast %239 : vector<128xf32> to vector<1x1x1x128xf32>
      tpu.vector_store %arg7[%c0_241, %c0_242, %c1_243, %c0_244], %242 {strides = array<i32>} : memref<1x1x2x128xf32, #tpu.memory_space<vmem>>, vector<1x1x1x128xf32>,
    }
    %c16_i32_3 = arith.constant 16 : i32
    return
  }
  func.func @transform_0(%arg0: i32, %arg1: i32) -> (i32, i32, i32, i32, i32) {
    %c0_i32 = arith.constant 0 : i32
    %0 = arith.addi %arg1, %c0_i32 : i32
    %c0_i32_0 = arith.constant 0 : i32
    %c0_i32_1 = arith.constant 0 : i32
    %c0_i32_2 = arith.constant 0 : i32
    %c0_i32_3 = arith.constant 0 : i32
    return %arg0, %0, %c0_i32_0, %c0_i32_1, %c0_i32_2 : i32, i32, i32, i32, i32
  }
  func.func @transform_1(%arg0: i32, %arg1: i32) -> (i32, i32, i32, i32, i32) {
    %c1_i32 = arith.constant 1 : i32
    %0 = arith.addi %arg1, %c1_i32 : i32
    %c0_i32 = arith.constant 0 : i32
    %c0_i32_0 = arith.constant 0 : i32
    %c0_i32_1 = arith.constant 0 : i32
    %c0_i32_2 = arith.constant 0 : i32
    return %arg0, %0, %c0_i32, %c0_i32_0, %c0_i32_1 : i32, i32, i32, i32, i32
  }
  func.func @transform_2(%arg0: i32, %arg1: i32) -> (i32, i32, i32, i32, i32) {
    %c2_i32 = arith.constant 2 : i32
    %0 = arith.addi %arg1, %c2_i32 : i32
    %c0_i32 = arith.constant 0 : i32
    %c0_i32_0 = arith.constant 0 : i32
    %c0_i32_1 = arith.constant 0 : i32
    %c0_i32_2 = arith.constant 0 : i32
    return %arg0, %0, %c0_i32, %c0_i32_0, %c0_i32_1 : i32, i32, i32, i32, i32
  }
  func.func @transform_3(%arg0: i32, %arg1: i32) -> (i32, i32, i32) {
    %c0_i32 = arith.constant 0 : i32
    %c0_i32_0 = arith.constant 0 : i32
    %c0_i32_1 = arith.constant 0 : i32
    %c0_i32_2 = arith.constant 0 : i32
    return %c0_i32, %c0_i32_0, %c0_i32_1 : i32, i32, i32
  }
  func.func @transform_4(%arg0: i32, %arg1: i32) -> (i32, i32, i32, i32, i32) {
    %c0_i32 = arith.constant 0 : i32
    %c0_i32_0 = arith.constant 0 : i32
    %c0_i32_1 = arith.constant 0 : i32
    %c0_i32_2 = arith.constant 0 : i32
    return %arg0, %arg1, %c0_i32, %c0_i32_0, %c0_i32_1 : i32, i32, i32, i32, i32
  }
  func.func @transform_5(%arg0: i32, %arg1: i32) -> (i32, i32, i32, i32) {
    %c0_i32 = arith.constant 0 : i32
    %c0_i32_0 = arith.constant 0 : i32
    %c0_i32_1 = arith.constant 0 : i32
    return %arg0, %arg1, %c0_i32, %c0_i32_0 : i32, i32, i32, i32
  }
}

</mosaic_0001>

<llo_original>
// kernel: tpu_custom_call.1
$region0: #{tpu_custom_call.1}
  #allocation0 [shape = 'u32[]', space=smem, size = 0x4, offset = 0x4, fixed_abs, tag = 'smem constant byte address 0x4 - core index']
  #allocation1 [shape = 'u32[144,128]{1,0:T(1,128)}', space=vmem, size = 0x12000, scoped, tag = 'internal scratch']
  %s0 = inlined_call_operand.vmem [shape: bf16[2,18,18,18,4], index: 0, kind: input, shape index: {}]
  %s1 = inlined_call_operand.vmem [shape: bf16[2,18,18,18,4], index: 1, kind: input, shape index: {}]
  %s2 = inlined_call_operand.vmem [shape: bf16[2,18,18,18,4], index: 2, kind: input, shape index: {}]
  %s3 = inlined_call_operand.vmem [shape: bf16[27,4,128], index: 3, kind: input, shape index: {}]
  %s4 = inlined_call_operand.hbm [shape: f32[2,16,16,16,128], index: 4, kind: output, shape index: {0}]
  %s5 = inlined_call_operand.hbm [shape: f32[2,16,2,128], index: 5, kind: output, shape index: {1}]
  %6 = xla_tuple %s4, %s5
  %s7 = sld [smem:[#allocation0]]
  $region64: #{tpu_custom_call.1} parent=0
    _
  %s9 = ssub.s32 1, %s7
  %s10 = scalar_select 0, %s9, %s7
  $region1: #{tpu_custom_call.1} parent=0
    #allocation2 [shape = 'u8[262144]{0}', space=vmem, size = 0x40000, scoped, tag = 'output window, operand 0']
    #allocation3 [shape = 's32[2]{0}', space=sflag, size = 0x8, scoped, tag = 'scoped memory for tpu_custom_call.1']
    #allocation4 [shape = 'u8[2048]{0}', space=vmem, size = 0x800, scoped, tag = 'output window, operand 1']
    #allocation5 [shape = 's32[2]{0}', space=sflag, size = 0x8, scoped, tag = 'scoped memory for tpu_custom_call.1']
    %11 = vsyncpa [#allocation3], 0
    %s12 = scalar_lea.sflag [#allocation3], 1
    %13 = vsyncpa %s12, 0
    %14 = vsyncpa [#allocation5], 0
    %s15 = scalar_lea.sflag [#allocation5], 1
    %16 = vsyncpa %s15, 0
    loop: start=0, step=1, limit=34
    $region2: #{tpu_custom_call.1} parent=1 // loop_pre_header
      _
    $region3: #{tpu_custom_call.1} parent=1 // loop_header
      %s18 = sphi 0, %s22
      %p19 = scmp.ge.s32.totalorder %s18, 34
      %s25 = sphi 0, %s37
      %s26 = sphi 0, %s33
      %s27 = sphi 0, %s25
      %s28 = sphi 0, %s26
      %s29 = sphi 0, %s27
      %s30 = sphi 0, %s28
      %s42 = sphi 0, %s44
      %s45 = sphi 0, %s42
      %s46 = sphi 0, %s45
      %s62 = sphi 0, %s46
      %s72 = sphi 0, %s74
      %s75 = sphi 0, %s72
      %s76 = sphi 0, %s75
      %s92 = sphi 0, %s76
      %s102 = sphi 0, %s104
      %s105 = sphi 0, %s102
      %s106 = sphi 0, %s105
      %s122 = sphi 0, %s106
      %s126 = sphi 0, %s126
      %s128 = sphi 0, %s126
      %s129 = sphi 0, %s128
      %s143 = sphi 0, %s129
      %s151 = sphi 0, %s153
      %s154 = sphi 0, %s151
      %s155 = sphi 0, %s154
      %s171 = sphi 0, %s155
      %s179 = sphi 0, %s181
      %s182 = sphi 0, %s179
      %s183 = sphi 0, %s182
      %s199 = sphi 0, %s183
    $region4: #{tpu_custom_call.1} parent=1 // loop_header_branch
      %21 = sbr.rel (%p19) target = $region8
    $region5: #{tpu_custom_call.1} parent=1 // loop_body
      %s23 = ssub.s32 %s18, 1
      %s24 = ssub.s32 %s18, 2
      %s31 = sadd.s32 1, %s26
      %p32 = scmp.ge.s32.totalorder %s31, 16
      %s33 = scalar_select %p32, 0, %s31
      %s34 = sadd.s32 1, %s25
      %s35 = scalar_select %p32, %s34, %s25
      %p36 = scmp.ge.s32.totalorder %s35, 2
      %s37 = scalar_select %p36, 0, %s35
      %s38 = ssub.s32 %s25, %s37
      %s39 = ssub.s32 %s26, %s33
      %s40 = sor.u32 %s38, %s39
      %p41 = scmp.eq.s32.totalorder %s40, 0
      %s43 = sadd.s32 %s42, 1
      %s44 = scalar_select %p41, %s42, %s43
      %p47 = pneg %p41
      %p48 = scmp.eq.s32.totalorder %s18, 31
      %p49 = por %p47, %p48
      %p50 = scmp.ne.s32.totalorder %s42, %s45
      %p51 = scmp.eq.s32.totalorder %s18, 0
      %p52 = por %p50, %p51
      %p53 = scmp.ne.s32.totalorder %s42, %s45
      %p54 = scmp.eq.s32.totalorder %s23, 31
      %p55 = por %p53, %p54
      %p56 = scmp.ne.s32.totalorder %s45, %s46
      %p57 = scmp.eq.s32.totalorder %s23, 0
      %p58 = por %p56, %p57
      %p59 = scmp.ne.s32.totalorder %s45, %s46
      %p60 = scmp.eq.s32.totalorder %s24, 31
      %p61 = por %p59, %p60
      %p63 = scmp.ne.s32.totalorder %s46, %s62
      %p64 = scmp.eq.s32.totalorder %s24, 0
      %p65 = por %p63, %p64
      %s66 = sadd.s32 %s26, 1
      %s67 = sadd.s32 %s33, 1
      %s68 = ssub.s32 %s25, %s37
      %s69 = ssub.s32 %s66, %s67
      %s70 = sor.u32 %s68, %s69
      %p71 = scmp.eq.s32.totalorder %s70, 0
      %s73 = sadd.s32 %s72, 1
      %s74 = scalar_select %p71, %s72, %s73
      %p77 = pneg %p71
      %p78 = scmp.eq.s32.totalorder %s18, 31
      %p79 = por %p77, %p78
      %p80 = scmp.ne.s32.totalorder %s72, %s75
      %p81 = scmp.eq.s32.totalorder %s18, 0
      %p82 = por %p80, %p81
      %p83 = scmp.ne.s32.totalorder %s72, %s75
      %p84 = scmp.eq.s32.totalorder %s23, 31
      %p85 = por %p83, %p84
      %p86 = scmp.ne.s32.totalorder %s75, %s76
      %p87 = scmp.eq.s32.totalorder %s23, 0
      %p88 = por %p86, %p87
      %p89 = scmp.ne.s32.totalorder %s75, %s76
      %p90 = scmp.eq.s32.totalorder %s24, 31
      %p91 = por %p89, %p90
      %p93 = scmp.ne.s32.totalorder %s76, %s92
      %p94 = scmp.eq.s32.totalorder %s24, 0
      %p95 = por %p93, %p94
      %s96 = sadd.s32 %s26, 2
      %s97 = sadd.s32 %s33, 2
      %s98 = ssub.s32 %s25, %s37
      %s99 = ssub.s32 %s96, %s97
      %s100 = sor.u32 %s98, %s99
      %p101 = scmp.eq.s32.totalorder %s100, 0
      %s103 = sadd.s32 %s102, 1
      %s104 = scalar_select %p101, %s102, %s103
      %p107 = pneg %p101
      %p108 = scmp.eq.s32.totalorder %s18, 31
      %p109 = por %p107, %p108
      %p110 = scmp.ne.s32.totalorder %s102, %s105
      %p111 = scmp.eq.s32.totalorder %s18, 0
      %p112 = por %p110, %p111
      %p113 = scmp.ne.s32.totalorder %s102, %s105
      %p114 = scmp.eq.s32.totalorder %s23, 31
      %p115 = por %p113, %p114
      %p116 = scmp.ne.s32.totalorder %s105, %s106
      %p117 = scmp.eq.s32.totalorder %s23, 0
      %p118 = por %p116, %p117
      %p119 = scmp.ne.s32.totalorder %s105, %s106
      %p120 = scmp.eq.s32.totalorder %s24, 31
      %p121 = por %p119, %p120
      %p123 = scmp.ne.s32.totalorder %s106, %s122
      %p124 = scmp.eq.s32.totalorder %s24, 0
      %p125 = por %p123, %p124
      %s127 = sadd.s32 %s126, 1
      %p130 = scmp.eq.s32.totalorder %s18, 31
      %p131 = scmp.ne.s32.totalorder %s126, %s128
      %p132 = scmp.eq.s32.totalorder %s18, 0
      %p133 = por %p131, %p132
      %p134 = scmp.ne.s32.totalorder %s126, %s128
      %p135 = scmp.eq.s32.totalorder %s23, 31
      %p136 = por %p134, %p135
      %p137 = scmp.ne.s32.totalorder %s128, %s129
      %p138 = scmp.eq.s32.totalorder %s23, 0
      %p139 = por %p137, %p138
      %p140 = scmp.ne.s32.totalorder %s128, %s129
      %p141 = scmp.eq.s32.totalorder %s24, 31
      %p142 = por %p140, %p141
      %p144 = scmp.ne.s32.totalorder %s129, %s143
      %p145 = scmp.eq.s32.totalorder %s24, 0
      %p146 = por %p144, %p145
      %s147 = ssub.s32 %s25, %s37
      %s148 = ssub.s32 %s26, %s33
      %s149 = sor.u32 %s147, %s148
      %p150 = scmp.eq.s32.totalorder %s149, 0
      %s152 = sadd.s32 %s151, 1
      %s153 = scalar_select %p150, %s151, %s152
      %p156 = pneg %p150
      %p157 = scmp.eq.s32.totalorder %s18, 31
      %p158 = por %p156, %p157
      %p159 = scmp.ne.s32.totalorder %s151, %s154
      %p160 = scmp.eq.s32.totalorder %s18, 0
      %p161 = por %p159, %p160
      %p162 = scmp.ne.s32.totalorder %s151, %s154
      %p163 = scmp.eq.s32.totalorder %s23, 31
      %p164 = por %p162, %p163
      %p165 = scmp.ne.s32.totalorder %s154, %s155
      %p166 = scmp.eq.s32.totalorder %s23, 0
      %p167 = por %p165, %p166
      %p168 = scmp.ne.s32.totalorder %s154, %s155
      %p169 = scmp.eq.s32.totalorder %s24, 31
      %p170 = por %p168, %p169
      %p172 = scmp.ne.s32.totalorder %s155, %s171
      %p173 = scmp.eq.s32.totalorder %s24, 0
      %p174 = por %p172, %p173
      %s175 = ssub.s32 %s25, %s37
      %s176 = ssub.s32 %s26, %s33
      %s177 = sor.u32 %s175, %s176
      %p178 = scmp.eq.s32.totalorder %s177, 0
      %s180 = sadd.s32 %s179, 1
      %s181 = scalar_select %p178, %s179, %s180
      %p184 = pneg %p178
      %p185 = scmp.eq.s32.totalorder %s18, 31
      %p186 = por %p184, %p185
      %p187 = scmp.ne.s32.totalorder %s179, %s182
      %p188 = scmp.eq.s32.totalorder %s18, 0
      %p189 = por %p187, %p188
      %p190 = scmp.ne.s32.totalorder %s179, %s182
      %p191 = scmp.eq.s32.totalorder %s23, 31
      %p192 = por %p190, %p191
      %p193 = scmp.ne.s32.totalorder %s182, %s183
      %p194 = scmp.eq.s32.totalorder %s23, 0
      %p195 = por %p193, %p194
      %p196 = scmp.ne.s32.totalorder %s182, %s183
      %p197 = scmp.eq.s32.totalorder %s24, 31
      %p198 = por %p196, %p197
      %p200 = scmp.ne.s32.totalorder %s183, %s199
      %p201 = scmp.eq.s32.totalorder %s24, 0
      %p202 = por %p200, %p201
      %p203 = scmp.le.s32.totalorder 1, %s18
      %p204 = scmp.lt.s32.totalorder %s18, 33
      %p205 = pnand %p203, %p204
      %p206 = pneg %p205
      // Predicated region
      $region9: #{tpu_custom_call.1} parent=5 // pred_check
        _
      $region10: #{tpu_custom_call.1} parent=5 // pred_check_branch
        %208 = sbr.rel (%p205) target = $region12
      $region11: #{tpu_custom_call.1} parent=5 // pred_region
        %s209 = ssub.s32 %s18, 1
        // Predicated region
        $region13: #{tpu_custom_call.1} parent=11 // pred_check
          %p210 = pneg %p139
        $region14: #{tpu_custom_call.1} parent=11 // pred_check_branch
          %212 = sbr.rel (%p210) target = $region16
        $region15: #{tpu_custom_call.1} parent=11 // pred_region
          _
        $region16: #{tpu_custom_call.1} parent=11 // pred_fallthru
          _
      $region12: #{tpu_custom_call.1} parent=5 // pred_fallthru
        _
      %p213 = scmp.lt.s32.totalorder %s18, 32
      // Predicated region
      $region17: #{tpu_custom_call.1} parent=5 // pred_check
        %p214 = pneg %p213
      $region18: #{tpu_custom_call.1} parent=5 // pred_check_branch
        %216 = sbr.rel (%p214) target = $region20
      $region19: #{tpu_custom_call.1} parent=5 // pred_region
        // Predicated region
        $region21: #{tpu_custom_call.1} parent=19 // pred_check
          %p217 = pneg %p52
        $region22: #{tpu_custom_call.1} parent=19 // pred_check_branch
          %219 = sbr.rel (%p217) target = $region24
        $region23: #{tpu_custom_call.1} parent=19 // pred_region
          %p220 = scmp.lt.s32.totalorder %s25, 1
          %s221 = scalar_select %p220, %s25, 1
          %p222 = scmp.lt.s32.totalorder %s26, 17
          %s223 = scalar_select %p222, %s26, 17
          %s224 = smul.addr %s223, 54
          %s225 = smul.addr %s221, 972
          %s226 = sadd.s32 %s224, %s225
          %s227 = smul.addr %s226, 4
          %s228 = scalar_lea.vmem %s0, %s227
        $region24: #{tpu_custom_call.1} parent=19 // pred_fallthru
          _
        // Predicated region
        $region25: #{tpu_custom_call.1} parent=19 // pred_check
          %p229 = pneg %p82
        $region26: #{tpu_custom_call.1} parent=19 // pred_check_branch
          %231 = sbr.rel (%p229) target = $region28
        $region27: #{tpu_custom_call.1} parent=19 // pred_region
          %s232 = sadd.s32 %s26, 1
          %p233 = scmp.lt.s32.totalorder %s25, 1
          %s234 = scalar_select %p233, %s25, 1
          %p235 = scmp.lt.s32.totalorder %s232, 17
          %s236 = scalar_select %p235, %s232, 17
          %s237 = smul.addr %s236, 54
          %s238 = smul.addr %s234, 972
          %s239 = sadd.s32 %s237, %s238
          %s240 = smul.addr %s239, 4
          %s241 = scalar_lea.vmem %s1, %s240
          %s242 = sadd.s32 %s26, 1
        $region28: #{tpu_custom_call.1} parent=19 // pred_fallthru
          _
        // Predicated region
        $region29: #{tpu_custom_call.1} parent=19 // pred_check
          %p243 = pneg %p112
        $region30: #{tpu_custom_call.1} parent=19 // pred_check_branch
          %245 = sbr.rel (%p243) target = $region32
        $region31: #{tpu_custom_call.1} parent=19 // pred_region
          %s246 = sadd.s32 %s26, 2
          %p247 = scmp.lt.s32.totalorder %s25, 1
          %s248 = scalar_select %p247, %s25, 1
          %p249 = scmp.lt.s32.totalorder %s246, 17
          %s250 = scalar_select %p249, %s246, 17
          %s251 = smul.addr %s250, 54
          %s252 = smul.addr %s248, 972
          %s253 = sadd.s32 %s251, %s252
          %s254 = smul.addr %s253, 4
          %s255 = scalar_lea.vmem %s2, %s254
          %s256 = sadd.s32 %s26, 2
        $region32: #{tpu_custom_call.1} parent=19 // pred_fallthru
          _
      $region20: #{tpu_custom_call.1} parent=5 // pred_fallthru
        _
      %p257 = scmp.le.s32.totalorder 1, %s18
      %p258 = scmp.lt.s32.totalorder %s18, 33
      %p259 = pnand %p257, %p258
      %p260 = pneg %p259
      // Predicated region
      $region33: #{tpu_custom_call.1} parent=5 // pred_check
        _
      $region34: #{tpu_custom_call.1} parent=5 // pred_check_branch
        %262 = sbr.rel (%p259) target = $region36
      $region35: #{tpu_custom_call.1} parent=5 // pred_region
        %s263 = ssub.s32 %s18, 1
        %p264 = scmp.lt.s32.totalorder %s27, 1
        %s265 = scalar_select %p264, %s27, 1
        %p266 = scmp.lt.s32.totalorder %s28, 17
        %s267 = scalar_select %p266, %s28, 17
        %s268 = smul.addr %s267, 54
        %s269 = smul.addr %s265, 972
        %s270 = sadd.s32 %s268, %s269
        %s271 = smul.addr %s270, 4
        %s272 = scalar_lea.vmem %s0, %s271
        %p273 = pneg %p58
        %p274 = pneg %p55
        %s275 = sadd.s32 %s28, 1
        %p276 = scmp.lt.s32.totalorder %s27, 1
        %s277 = scalar_select %p276, %s27, 1
        %p278 = scmp.lt.s32.totalorder %s275, 17
        %s279 = scalar_select %p278, %s275, 17
        %s280 = smul.addr %s279, 54
        %s281 = smul.addr %s277, 972
        %s282 = sadd.s32 %s280, %s281
        %s283 = smul.addr %s282, 4
        %s284 = scalar_lea.vmem %s1, %s283
        %p285 = pneg %p88
        %p286 = pneg %p85
        %s287 = sadd.s32 %s28, 2
        %p288 = scmp.lt.s32.totalorder %s27, 1
        %s289 = scalar_select %p288, %s27, 1
        %p290 = scmp.lt.s32.totalorder %s287, 17
        %s291 = scalar_select %p290, %s287, 17
        %s292 = smul.addr %s291, 54
        %s293 = smul.addr %s289, 972
        %s294 = sadd.s32 %s292, %s293
        %s295 = smul.addr %s294, 4
        %s296 = scalar_lea.vmem %s2, %s295
        %p297 = pneg %p118
        %p298 = pneg %p115
        %p299 = pneg %p139
        %p300 = pneg %p136
        %p301 = pneg %p167
        %p302 = pneg %p164
        %s303 = sand.u32 %s154, 1
        %s304 = scalar_lea.sflag [#allocation3], %s303
        %s305 = sand.u32 %s154, 1
        %s306 = smul.addr %s305, 256
        %s307 = scalar_lea.vmem [#allocation2], %s306
        %p308 = pneg %p195
        %p309 = pneg %p192
        %s310 = sand.u32 %s182, 1
        %s311 = scalar_lea.sflag [#allocation5], %s310
        %s312 = sand.u32 %s182, 1
        %s313 = smul.addr %s312, 2
        %s314 = scalar_lea.vmem [#allocation4], %s313
        %p315 = scmp.lt.s32.totalorder %s27, 1
        %s316 = scalar_select %p315, %s27, 1
        %p317 = scmp.lt.s32.totalorder %s28, 17
        %s318 = scalar_select %p317, %s28, 17
        %s319 = smul.addr %s318, 54
        %s320 = smul.addr %s316, 972
        %s321 = sadd.s32 %s319, %s320
        %s322 = smul.addr %s321, 4
        %s323 = scalar_lea.vmem %s0, %s322
        %s324 = sadd.s32 %s28, 1
        %p325 = scmp.lt.s32.totalorder %s27, 1
        %s326 = scalar_select %p325, %s27, 1
        %p327 = scmp.lt.s32.totalorder %s324, 17
        %s328 = scalar_select %p327, %s324, 17
        %s329 = smul.addr %s328, 54
        %s330 = smul.addr %s326, 972
        %s331 = sadd.s32 %s329, %s330
        %s332 = smul.addr %s331, 4
        %s333 = scalar_lea.vmem %s1, %s332
        %s334 = sadd.s32 %s28, 1
        %s335 = sadd.s32 %s28, 2
        %p336 = scmp.lt.s32.totalorder %s27, 1
        %s337 = scalar_select %p336, %s27, 1
        %p338 = scmp.lt.s32.totalorder %s335, 17
        %s339 = scalar_select %p338, %s335, 17
        %s340 = smul.addr %s339, 54
        %s341 = smul.addr %s337, 972
        %s342 = sadd.s32 %s340, %s341
        %s343 = smul.addr %s342, 4
        %s344 = scalar_lea.vmem %s2, %s343
        %s345 = sadd.s32 %s28, 2
        %347 = vst [vmem:[%s314] sm:$0x3] 0.0
        loop: start=0, step=1, limit=16
        $region37: #{tpu_custom_call.1} parent=35 // loop_pre_header
          _
        $region38: #{tpu_custom_call.1} parent=35 // loop_header
          %s349 = sphi 0, %s353
          %p350 = scmp.ge.s32.totalorder %s349, 16
        $region39: #{tpu_custom_call.1} parent=35 // loop_header_branch
          %352 = sbr.rel (%p350) target = $region43
        $region40: #{tpu_custom_call.1} parent=35 // loop_body
          %s354 = smul.u32 %s349, 3
          %s355 = smul.addr %s354, 4
          %s356 = scalar_lea.vmem %s323, %s355
          %v357 = vld [vmem:[%s356] sm:$0xf]
          %v358 = vld [vmem:[%s356 + $0x4] sm:$0xf]
          %v359 = vld [vmem:[%s3] sm:$0x3]
          %v360 = vld [vmem:[%s356 + $0x8] sm:$0x1]
          %s361 = scalar_lea.vmem %s3, 2
          %v362 = vld [vmem:[%s361] sm:$0x3]
          %v366 = vunpack.c.l.b16 %v357
          %v367 = vunpack.c.l.b16 %v358
          %v368 = vunpack.c.l.b16 %v360
          %v369 = vpack.c.b16 %v367, %v366
          %v370 = vpack.c.b16 %v368, %v368
          %vm371 = vsmask.f32 7424
          %v373 = vshrl.u32 %v369, 16
          %v375 = vshll.u32 %v369, 16
          %v377 = vrot.slane %v375, 1
          %v378 = vor.u32 %v373, %v377
          %v380 = vshll.u32 %v370, 16
          %v382 = vrot.slane %v380, 1
          %v383 = vsel %vm371, %v378, %v382
          %vm384 = vcmask 31744
          %v386 = vsel %vm384, %v383, 0
          %vm388 = vcmask 1041408
          %v390 = vsel %vm388, %v362, 0
          %392 = vmatprep.subr.bf16.mxu0 0
          %393 = vmatpush1.bf16.msra.mxu0 %v390
          %394 = vmatprep.subr.bf16.mxu0 0
          %395 = vmatpush1.bf16.msra.mxu0 0
          %396 = vmatprep.subr.bf16.mxu0 0
          %397 = vmatpush1.bf16.msra.mxu0 0
          %398 = vmatprep.subr.bf16.mxu0 0
          %399 = vmatpush1.bf16.msra.mxu0 0
          %400 = vmatprep.subr.bf16.mxu0 0
          %401 = vmatpush1.bf16.msra.mxu0 0
          %402 = vmatprep.subr.bf16.mxu0 0
          %403 = vmatpush1.bf16.msra.mxu0 0
          %404 = vmatprep.subr.bf16.mxu0 0
          %405 = vmatpush1.bf16.msra.mxu0 0
          %406 = vmatprep.subr.bf16.mxu0 0
          %407 = vmatpush1.bf16.msra.mxu0 0
          %408 = vmatprep.subr.bf16.mxu0 0
          %409 = vmatpush1.bf16.msra.mxu0 0
          %410 = vmatprep.subr.bf16.mxu0 0
          %411 = vmatpush1.bf16.msra.mxu0 0
          %412 = vmatprep.subr.bf16.mxu0 0
          %413 = vmatpush1.bf16.msra.mxu0 0
          %414 = vmatprep.subr.bf16.mxu0 0
          %415 = vmatpush1.bf16.msra.mxu0 0
          %416 = vmatprep.subr.bf16.mxu0 0
          %417 = vmatpush1.bf16.msra.mxu0 0
          %418 = vmatprep.subr.bf16.mxu0 0
          %419 = vmatpush1.bf16.msra.mxu0 0
          %420 = vmatprep.subr.bf16.mxu0 0
          %421 = vmatpush1.bf16.msra.mxu0 0
          %422 = vmatprep.subr.bf16.mxu0 0
          %423 = vmatpush1.bf16.msra.mxu0 0
          %424 = vmatprep.mubr.bf16.mxu0 0
          %425 = vmatmul.mubr.bf16.gmra.mrb[0].mxu0 %v386
          %v426 = vpop.f32.mrb[0].mxu0
          %v427 = vadd.f32 0.0, %v426
          %v428 = vpop.f32.mrb[0].mxu0
          %v429 = vpop.f32.mrb[0].mxu0
          %v430 = vadd.f32 0.0, %v429
          %v431 = vpop.f32.mrb[0].mxu0
          %432 = vdwg.mxu0
          %v433 = vsel %vm384, %v369, 0
          %v436 = vsel %vm388, %v359, 0
          %438 = vmatprep.subr.bf16.mxu0 0
          %439 = vmatpush1.bf16.msra.mxu0 %v436
          %440 = vmatprep.subr.bf16.mxu0 0
          %441 = vmatpush1.bf16.msra.mxu0 0
          %442 = vmatprep.subr.bf16.mxu0 0
          %443 = vmatpush1.bf16.msra.mxu0 0
          %444 = vmatprep.subr.bf16.mxu0 0
          %445 = vmatpush1.bf16.msra.mxu0 0
          %446 = vmatprep.subr.bf16.mxu0 0
          %447 = vmatpush1.bf16.msra.mxu0 0
          %448 = vmatprep.subr.bf16.mxu0 0
          %449 = vmatpush1.bf16.msra.mxu0 0
          %450 = vmatprep.subr.bf16.mxu0 0
          %451 = vmatpush1.bf16.msra.mxu0 0
          %452 = vmatprep.subr.bf16.mxu0 0
          %453 = vmatpush1.bf16.msra.mxu0 0
          %454 = vmatprep.subr.bf16.mxu0 0
          %455 = vmatpush1.bf16.msra.mxu0 0
          %456 = vmatprep.subr.bf16.mxu0 0
          %457 = vmatpush1.bf16.msra.mxu0 0
          %458 = vmatprep.subr.bf16.mxu0 0
          %459 = vmatpush1.bf16.msra.mxu0 0
          %460 = vmatprep.subr.bf16.mxu0 0
          %461 = vmatpush1.bf16.msra.mxu0 0
          %462 = vmatprep.subr.bf16.mxu0 0
          %463 = vmatpush1.bf16.msra.mxu0 0
          %464 = vmatprep.subr.bf16.mxu0 0
          %465 = vmatpush1.bf16.msra.mxu0 0
          %466 = vmatprep.subr.bf16.mxu0 0
          %467 = vmatpush1.bf16.msra.mxu0 0
          %468 = vmatprep.subr.bf16.mxu0 0
          %469 = vmatpush1.bf16.msra.mxu0 0
          %470 = vmatprep.mubr.bf16.mxu0 0
          %471 = vmatmul.mubr.bf16.gmra.mrb[0].mxu0 %v433
          %v472 = vpop.f32.mrb[0].mxu0
          %v473 = vadd.f32 %v427, %v472
          %v474 = vpop.f32.mrb[0].mxu0
          %v475 = vpop.f32.mrb[0].mxu0
          %v476 = vadd.f32 %v430, %v475
          %v477 = vpop.f32.mrb[0].mxu0
          %478 = vdwg.mxu0
          %v479 = vld [vmem:[%s356] sm:$0xe]
          %s480 = scalar_lea.vmem %s3, 4
          %v481 = vld [vmem:[%s480] sm:$0x3]
          %v483 = vunpack.c.l.b16 %v479
          %v484 = vpack.c.b16 %v367, %v483
          %vm485 = vcmask 1046528
          %v486 = vrot.slane %v484, 1
          %v487 = vrot.slane %v370, 1
          %v488 = vsel %vm485, %v486, %v487
          %v490 = vsel %vm384, %v488, 0
          %v493 = vsel %vm388, %v481, 0
          %495 = vmatprep.subr.bf16.mxu0 0
          %496 = vmatpush1.bf16.msra.mxu0 %v493
          %497 = vmatprep.subr.bf16.mxu0 0
          %498 = vmatpush1.bf16.msra.mxu0 0
          %499 = vmatprep.subr.bf16.mxu0 0
          %500 = vmatpush1.bf16.msra.mxu0 0
          %501 = vmatprep.subr.bf16.mxu0 0
          %502 = vmatpush1.bf16.msra.mxu0 0
          %503 = vmatprep.subr.bf16.mxu0 0
          %504 = vmatpush1.bf16.msra.mxu0 0
          %505 = vmatprep.subr.bf16.mxu0 0
          %506 = vmatpush1.bf16.msra.mxu0 0
          %507 = vmatprep.subr.bf16.mxu0 0
          %508 = vmatpush1.bf16.msra.mxu0 0
          %509 = vmatprep.subr.bf16.mxu0 0
          %510 = vmatpush1.bf16.msra.mxu0 0
          %511 = vmatprep.subr.bf16.mxu0 0
          %512 = vmatpush1.bf16.msra.mxu0 0
          %513 = vmatprep.subr.bf16.mxu0 0
          %514 = vmatpush1.bf16.msra.mxu0 0
          %515 = vmatprep.subr.bf16.mxu0 0
          %516 = vmatpush1.bf16.msra.mxu0 0
          %517 = vmatprep.subr.bf16.mxu0 0
          %518 = vmatpush1.bf16.msra.mxu0 0
          %519 = vmatprep.subr.bf16.mxu0 0
          %520 = vmatpush1.bf16.msra.mxu0 0
          %521 = vmatprep.subr.bf16.mxu0 0
          %522 = vmatpush1.bf16.msra.mxu0 0
          %523 = vmatprep.subr.bf16.mxu0 0
          %524 = vmatpush1.bf16.msra.mxu0 0
          %525 = vmatprep.subr.bf16.mxu0 0
          %526 = vmatpush1.bf16.msra.mxu0 0
          %527 = vmatprep.mubr.bf16.mxu0 0
          %528 = vmatmul.mubr.bf16.gmra.mrb[0].mxu0 %v490
          %v529 = vpop.f32.mrb[0].mxu0
          %v530 = vadd.f32 0.0, %v529
          %v531 = vpop.f32.mrb[0].mxu0
          %v532 = vpop.f32.mrb[0].mxu0
          %v533 = vadd.f32 0.0, %v532
          %v534 = vpop.f32.mrb[0].mxu0
          %535 = vdwg.mxu0
          %v536 = vadd.f32 %v473, %v530
          %v537 = vadd.f32 %v476, %v533
          %s538 = sadd.s32 %s349, 1
          %s539 = smul.u32 %s538, 3
          %s540 = smul.addr %s539, 4
          %s541 = scalar_lea.vmem %s323, %s540
          %v542 = vld [vmem:[%s541] sm:$0xf]
          %v543 = vld [vmem:[%s541 + $0x4] sm:$0xf]
          %s544 = scalar_lea.vmem %s3, 6
          %v545 = vld [vmem:[%s544] sm:$0x3]
          %v548 = vunpack.c.l.b16 %v542
          %v549 = vunpack.c.l.b16 %v543
          %v550 = vpack.c.b16 %v549, %v548
          %v552 = vsel %vm384, %v550, 0
          %v555 = vsel %vm388, %v545, 0
          %557 = vmatprep.subr.bf16.mxu0 0
          %558 = vmatpush1.bf16.msra.mxu0 %v555
          %559 = vmatprep.subr.bf16.mxu0 0
          %560 = vmatpush1.bf16.msra.mxu0 0
          %561 = vmatprep.subr.bf16.mxu0 0
          %562 = vmatpush1.bf16.msra.mxu0 0
          %563 = vmatprep.subr.bf16.mxu0 0
          %564 = vmatpush1.bf16.msra.mxu0 0
          %565 = vmatprep.subr.bf16.mxu0 0
          %566 = vmatpush1.bf16.msra.mxu0 0
          %567 = vmatprep.subr.bf16.mxu0 0
          %568 = vmatpush1.bf16.msra.mxu0 0
          %569 = vmatprep.subr.bf16.mxu0 0
          %570 = vmatpush1.bf16.msra.mxu0 0
          %571 = vmatprep.subr.bf16.mxu0 0
          %572 = vmatpush1.bf16.msra.mxu0 0
          %573 = vmatprep.subr.bf16.mxu0 0
          %574 = vmatpush1.bf16.msra.mxu0 0
          %575 = vmatprep.subr.bf16.mxu0 0
          %576 = vmatpush1.bf16.msra.mxu0 0
          %577 = vmatprep.subr.bf16.mxu0 0
          %578 = vmatpush1.bf16.msra.mxu0 0
          %579 = vmatprep.subr.bf16.mxu0 0
          %580 = vmatpush1.bf16.msra.mxu0 0
          %581 = vmatprep.subr.bf16.mxu0 0
          %582 = vmatpush1.bf16.msra.mxu0 0
          %583 = vmatprep.subr.bf16.mxu0 0
          %584 = vmatpush1.bf16.msra.mxu0 0
          %585 = vmatprep.subr.bf16.mxu0 0
          %586 = vmatpush1.bf16.msra.mxu0 0
          %587 = vmatprep.subr.bf16.mxu0 0
          %588 = vmatpush1.bf16.msra.mxu0 0
          %589 = vmatprep.mubr.bf16.mxu0 0
          %590 = vmatmul.mubr.bf16.gmra.mrb[0].mxu0 %v552
          %v591 = vpop.f32.mrb[0].mxu0
          %v592 = vadd.f32 0.0, %v591
          %v593 = vpop.f32.mrb[0].mxu0
          %v594 = vpop.f32.mrb[0].mxu0
          %v595 = vadd.f32 0.0, %v594
          %v596 = vpop.f32.mrb[0].mxu0
          %597 = vdwg.mxu0
          %v598 = vadd.f32 %v536, %v592
          %v599 = vadd.f32 %v537, %v595
          %v600 = vld [vmem:[%s541] sm:$0xf]
          %v601 = vld [vmem:[%s541 + $0x4] sm:$0xf]
          %v602 = vld [vmem:[%s541 + $0x8] sm:$0x1]
          %s603 = scalar_lea.vmem %s3, 8
          %v604 = vld [vmem:[%s603] sm:$0x3]
          %v608 = vunpack.c.l.b16 %v600
          %v609 = vunpack.c.l.b16 %v601
          %v610 = vunpack.c.l.b16 %v602
          %v611 = vpack.c.b16 %v609, %v608
          %v612 = vpack.c.b16 %v610, %v610
          %v614 = vshrl.u32 %v611, 16
          %v616 = vshll.u32 %v611, 16
          %v618 = vrot.slane %v616, 1
          %v619 = vor.u32 %v614, %v618
          %v621 = vshll.u32 %v612, 16
          %v623 = vrot.slane %v621, 1
          %v624 = vsel %vm371, %v619, %v623
          %v626 = vsel %vm384, %v624, 0
          %v629 = vsel %vm388, %v604, 0
          %631 = vmatprep.subr.bf16.mxu0 0
          %632 = vmatpush1.bf16.msra.mxu0 %v629
          %633 = vmatprep.subr.bf16.mxu0 0
          %634 = vmatpush1.bf16.msra.mxu0 0
          %635 = vmatprep.subr.bf16.mxu0 0
          %636 = vmatpush1.bf16.msra.mxu0 0
          %637 = vmatprep.subr.bf16.mxu0 0
          %638 = vmatpush1.bf16.msra.mxu0 0
          %639 = vmatprep.subr.bf16.mxu0 0
          %640 = vmatpush1.bf16.msra.mxu0 0
          %641 = vmatprep.subr.bf16.mxu0 0
          %642 = vmatpush1.bf16.msra.mxu0 0
          %643 = vmatprep.subr.bf16.mxu0 0
          %644 = vmatpush1.bf16.msra.mxu0 0
          %645 = vmatprep.subr.bf16.mxu0 0
          %646 = vmatpush1.bf16.msra.mxu0 0
          %647 = vmatprep.subr.bf16.mxu0 0
          %648 = vmatpush1.bf16.msra.mxu0 0
          %649 = vmatprep.subr.bf16.mxu0 0
          %650 = vmatpush1.bf16.msra.mxu0 0
          %651 = vmatprep.subr.bf16.mxu0 0
          %652 = vmatpush1.bf16.msra.mxu0 0
          %653 = vmatprep.subr.bf16.mxu0 0
          %654 = vmatpush1.bf16.msra.mxu0 0
          %655 = vmatprep.subr.bf16.mxu0 0
          %656 = vmatpush1.bf16.msra.mxu0 0
          %657 = vmatprep.subr.bf16.mxu0 0
          %658 = vmatpush1.bf16.msra.mxu0 0
          %659 = vmatprep.subr.bf16.mxu0 0
          %660 = vmatpush1.bf16.msra.mxu0 0
          %661 = vmatprep.subr.bf16.mxu0 0
          %662 = vmatpush1.bf16.msra.mxu0 0
          %663 = vmatprep.mubr.bf16.mxu0 0
          %664 = vmatmul.mubr.bf16.gmra.mrb[0].mxu0 %v626
          %v665 = vpop.f32.mrb[0].mxu0
          %v666 = vadd.f32 0.0, %v665
          %v667 = vpop.f32.mrb[0].mxu0
          %v668 = vpop.f32.mrb[0].mxu0
          %v669 = vadd.f32 0.0, %v668
          %v670 = vpop.f32.mrb[0].mxu0
          %671 = vdwg.mxu0
          %v672 = vadd.f32 %v598, %v666
          %v673 = vadd.f32 %v599, %v669
          %v674 = vld [vmem:[%s541] sm:$0xe]
          %s675 = scalar_lea.vmem %s3, 10
          %v676 = vld [vmem:[%s675] sm:$0x3]
          %v678 = vunpack.c.l.b16 %v674
          %v679 = vpack.c.b16 %v609, %v678
          %v680 = vrot.slane %v679, 1
          %v681 = vrot.slane %v612, 1
          %v682 = vsel %vm485, %v680, %v681
          %v684 = vsel %vm384, %v682, 0
          %v687 = vsel %vm388, %v676, 0
          %689 = vmatprep.subr.bf16.mxu0 0
          %690 = vmatpush1.bf16.msra.mxu0 %v687
          %691 = vmatprep.subr.bf16.mxu0 0
          %692 = vmatpush1.bf16.msra.mxu0 0
          %693 = vmatprep.subr.bf16.mxu0 0
          %694 = vmatpush1.bf16.msra.mxu0 0
          %695 = vmatprep.subr.bf16.mxu0 0
          %696 = vmatpush1.bf16.msra.mxu0 0
          %697 = vmatprep.subr.bf16.mxu0 0
          %698 = vmatpush1.bf16.msra.mxu0 0
          %699 = vmatprep.subr.bf16.mxu0 0
          %700 = vmatpush1.bf16.msra.mxu0 0
          %701 = vmatprep.subr.bf16.mxu0 0
          %702 = vmatpush1.bf16.msra.mxu0 0
          %703 = vmatprep.subr.bf16.mxu0 0
          %704 = vmatpush1.bf16.msra.mxu0 0
          %705 = vmatprep.subr.bf16.mxu0 0
          %706 = vmatpush1.bf16.msra.mxu0 0
          %707 = vmatprep.subr.bf16.mxu0 0
          %708 = vmatpush1.bf16.msra.mxu0 0
          %709 = vmatprep.subr.bf16.mxu0 0
          %710 = vmatpush1.bf16.msra.mxu0 0
          %711 = vmatprep.subr.bf16.mxu0 0
          %712 = vmatpush1.bf16.msra.mxu0 0
          %713 = vmatprep.subr.bf16.mxu0 0
          %714 = vmatpush1.bf16.msra.mxu0 0
          %715 = vmatprep.subr.bf16.mxu0 0
          %716 = vmatpush1.bf16.msra.mxu0 0
          %717 = vmatprep.subr.bf16.mxu0 0
          %718 = vmatpush1.bf16.msra.mxu0 0
          %719 = vmatprep.subr.bf16.mxu0 0
          %720 = vmatpush1.bf16.msra.mxu0 0
          %721 = vmatprep.mubr.bf16.mxu0 0
          %722 = vmatmul.mubr.bf16.gmra.mrb[0].mxu0 %v684
          %v723 = vpop.f32.mrb[0].mxu0
          %v724 = vadd.f32 0.0, %v723
          %v725 = vpop.f32.mrb[0].mxu0
          %v726 = vpop.f32.mrb[0].mxu0
          %v727 = vadd.f32 0.0, %v726
          %v728 = vpop.f32.mrb[0].mxu0
          %729 = vdwg.mxu0
          %v730 = vadd.f32 %v672, %v724
          %v731 = vadd.f32 %v673, %v727
          %s732 = sadd.s32 %s349, 2
          %s733 = smul.u32 %s732, 3
          %s734 = smul.addr %s733, 4
          %s735 = scalar_lea.vmem %s323, %s734
          %v736 = vld [vmem:[%s735] sm:$0xf]
          %v737 = vld [vmem:[%s735 + $0x4] sm:$0xf]
          %s738 = scalar_lea.vmem %s3, 12
          %v739 = vld [vmem:[%s738] sm:$0x3]
          %v742 = vunpack.c.l.b16 %v736
          %v743 = vunpack.c.l.b16 %v737
          %v744 = vpack.c.b16 %v743, %v742
          %v746 = vsel %vm384, %v744, 0
          %v749 = vsel %vm388, %v739, 0
          %751 = vmatprep.subr.bf16.mxu0 0
          %752 = vmatpush1.bf16.msra.mxu0 %v749
          %753 = vmatprep.subr.bf16.mxu0 0
          %754 = vmatpush1.bf16.msra.mxu0 0
          %755 = vmatprep.subr.bf16.mxu0 0
          %756 = vmatpush1.bf16.msra.mxu0 0
          %757 = vmatprep.subr.bf16.mxu0 0
          %758 = vmatpush1.bf16.msra.mxu0 0
          %759 = vmatprep.subr.bf16.mxu0 0
          %760 = vmatpush1.bf16.msra.mxu0 0
          %761 = vmatprep.subr.bf16.mxu0 0
          %762 = vmatpush1.bf16.msra.mxu0 0
          %763 = vmatprep.subr.bf16.mxu0 0
          %764 = vmatpush1.bf16.msra.mxu0 0
          %765 = vmatprep.subr.bf16.mxu0 0
          %766 = vmatpush1.bf16.msra.mxu0 0
          %767 = vmatprep.subr.bf16.mxu0 0
          %768 = vmatpush1.bf16.msra.mxu0 0
          %769 = vmatprep.subr.bf16.mxu0 0
          %770 = vmatpush1.bf16.msra.mxu0 0
          %771 = vmatprep.subr.bf16.mxu0 0
          %772 = vmatpush1.bf16.msra.mxu0 0
          %773 = vmatprep.subr.bf16.mxu0 0
          %774 = vmatpush1.bf16.msra.mxu0 0
          %775 = vmatprep.subr.bf16.mxu0 0
          %776 = vmatpush1.bf16.msra.mxu0 0
          %777 = vmatprep.subr.bf16.mxu0 0
          %778 = vmatpush1.bf16.msra.mxu0 0
          %779 = vmatprep.subr.bf16.mxu0 0
          %780 = vmatpush1.bf16.msra.mxu0 0
          %781 = vmatprep.subr.bf16.mxu0 0
          %782 = vmatpush1.bf16.msra.mxu0 0
          %783 = vmatprep.mubr.bf16.mxu0 0
          %784 = vmatmul.mubr.bf16.gmra.mrb[0].mxu0 %v746
          %v785 = vpop.f32.mrb[0].mxu0
          %v786 = vadd.f32 0.0, %v785
          %v787 = vpop.f32.mrb[0].mxu0
          %v788 = vpop.f32.mrb[0].mxu0
          %v789 = vadd.f32 0.0, %v788
          %v790 = vpop.f32.mrb[0].mxu0
          %791 = vdwg.mxu0
          %v792 = vadd.f32 %v730, %v786
          %v793 = vadd.f32 %v731, %v789
          %v794 = vld [vmem:[%s735] sm:$0xf]
          %v795 = vld [vmem:[%s735 + $0x4] sm:$0xf]
          %v796 = vld [vmem:[%s735 + $0x8] sm:$0x1]
          %s797 = scalar_lea.vmem %s3, 14
          %v798 = vld [vmem:[%s797] sm:$0x3]
          %v802 = vunpack.c.l.b16 %v794
          %v803 = vunpack.c.l.b16 %v795
          %v804 = vunpack.c.l.b16 %v796
          %v805 = vpack.c.b16 %v803, %v802
          %v806 = vpack.c.b16 %v804, %v804
          %v808 = vshrl.u32 %v805, 16
          %v810 = vshll.u32 %v805, 16
          %v812 = vrot.slane %v810, 1
          %v813 = vor.u32 %v808, %v812
          %v815 = vshll.u32 %v806, 16
          %v817 = vrot.slane %v815, 1
          %v818 = vsel %vm371, %v813, %v817
          %v820 = vsel %vm384, %v818, 0
          %v823 = vsel %vm388, %v798, 0
          %825 = vmatprep.subr.bf16.mxu0 0
          %826 = vmatpush1.bf16.msra.mxu0 %v823
          %827 = vmatprep.subr.bf16.mxu0 0
          %828 = vmatpush1.bf16.msra.mxu0 0
          %829 = vmatprep.subr.bf16.mxu0 0
          %830 = vmatpush1.bf16.msra.mxu0 0
          %831 = vmatprep.subr.bf16.mxu0 0
          %832 = vmatpush1.bf16.msra.mxu0 0
          %833 = vmatprep.subr.bf16.mxu0 0
          %834 = vmatpush1.bf16.msra.mxu0 0
          %835 = vmatprep.subr.bf16.mxu0 0
          %836 = vmatpush1.bf16.msra.mxu0 0
          %837 = vmatprep.subr.bf16.mxu0 0
          %838 = vmatpush1.bf16.msra.mxu0 0
          %839 = vmatprep.subr.bf16.mxu0 0
          %840 = vmatpush1.bf16.msra.mxu0 0
          %841 = vmatprep.subr.bf16.mxu0 0
          %842 = vmatpush1.bf16.msra.mxu0 0
          %843 = vmatprep.subr.bf16.mxu0 0
          %844 = vmatpush1.bf16.msra.mxu0 0
          %845 = vmatprep.subr.bf16.mxu0 0
          %846 = vmatpush1.bf16.msra.mxu0 0
          %847 = vmatprep.subr.bf16.mxu0 0
          %848 = vmatpush1.bf16.msra.mxu0 0
          %849 = vmatprep.subr.bf16.mxu0 0
          %850 = vmatpush1.bf16.msra.mxu0 0
          %851 = vmatprep.subr.bf16.mxu0 0
          %852 = vmatpush1.bf16.msra.mxu0 0
          %853 = vmatprep.subr.bf16.mxu0 0
          %854 = vmatpush1.bf16.msra.mxu0 0
          %855 = vmatprep.subr.bf16.mxu0 0
          %856 = vmatpush1.bf16.msra.mxu0 0
          %857 = vmatprep.mubr.bf16.mxu0 0
          %858 = vmatmul.mubr.bf16.gmra.mrb[0].mxu0 %v820
          %v859 = vpop.f32.mrb[0].mxu0
          %v860 = vadd.f32 0.0, %v859
          %v861 = vpop.f32.mrb[0].mxu0
          %v862 = vpop.f32.mrb[0].mxu0
          %v863 = vadd.f32 0.0, %v862
          %v864 = vpop.f32.mrb[0].mxu0
          %865 = vdwg.mxu0
          %v866 = vadd.f32 %v792, %v860
          %v867 = vadd.f32 %v793, %v863
          %v868 = vld [vmem:[%s735] sm:$0xe]
          %s869 = scalar_lea.vmem %s3, 16
          %v870 = vld [vmem:[%s869] sm:$0x3]
          %v872 = vunpack.c.l.b16 %v868
          %v873 = vpack.c.b16 %v803, %v872
          %v874 = vrot.slane %v873, 1
          %v875 = vrot.slane %v806, 1
          %v876 = vsel %vm485, %v874, %v875
          %v878 = vsel %vm384, %v876, 0
          %v881 = vsel %vm388, %v870, 0
          %883 = vmatprep.subr.bf16.mxu0 0
          %884 = vmatpush1.bf16.msra.mxu0 %v881
          %885 = vmatprep.subr.bf16.mxu0 0
          %886 = vmatpush1.bf16.msra.mxu0 0
          %887 = vmatprep.subr.bf16.mxu0 0
          %888 = vmatpush1.bf16.msra.mxu0 0
          %889 = vmatprep.subr.bf16.mxu0 0
          %890 = vmatpush1.bf16.msra.mxu0 0
          %891 = vmatprep.subr.bf16.mxu0 0
          %892 = vmatpush1.bf16.msra.mxu0 0
          %893 = vmatprep.subr.bf16.mxu0 0
          %894 = vmatpush1.bf16.msra.mxu0 0
          %895 = vmatprep.subr.bf16.mxu0 0
          %896 = vmatpush1.bf16.msra.mxu0 0
          %897 = vmatprep.subr.bf16.mxu0 0
          %898 = vmatpush1.bf16.msra.mxu0 0
          %899 = vmatprep.subr.bf16.mxu0 0
          %900 = vmatpush1.bf16.msra.mxu0 0
          %901 = vmatprep.subr.bf16.mxu0 0
          %902 = vmatpush1.bf16.msra.mxu0 0
          %903 = vmatprep.subr.bf16.mxu0 0
          %904 = vmatpush1.bf16.msra.mxu0 0
          %905 = vmatprep.subr.bf16.mxu0 0
          %906 = vmatpush1.bf16.msra.mxu0 0
          %907 = vmatprep.subr.bf16.mxu0 0
          %908 = vmatpush1.bf16.msra.mxu0 0
          %909 = vmatprep.subr.bf16.mxu0 0
          %910 = vmatpush1.bf16.msra.mxu0 0
          %911 = vmatprep.subr.bf16.mxu0 0
          %912 = vmatpush1.bf16.msra.mxu0 0
          %913 = vmatprep.subr.bf16.mxu0 0
          %914 = vmatpush1.bf16.msra.mxu0 0
          %915 = vmatprep.mubr.bf16.mxu0 0
          %916 = vmatmul.mubr.bf16.gmra.mrb[0].mxu0 %v878
          %v917 = vpop.f32.mrb[0].mxu0
          %v918 = vadd.f32 0.0, %v917
          %v919 = vpop.f32.mrb[0].mxu0
          %v920 = vpop.f32.mrb[0].mxu0
          %v921 = vadd.f32 0.0, %v920
          %v922 = vpop.f32.mrb[0].mxu0
          %923 = vdwg.mxu0
          %v924 = vadd.f32 %v866, %v918
          %v925 = vadd.f32 %v867, %v921
          %s926 = smul.addr %s354, 4
          %s927 = scalar_lea.vmem %s333, %s926
          %v928 = vld [vmem:[%s927] sm:$0xf]
          %v929 = vld [vmem:[%s927 + $0x4] sm:$0xf]
          %s930 = scalar_lea.vmem %s3, 18
          %v931 = vld [vmem:[%s930] sm:$0x3]
          %v934 = vunpack.c.l.b16 %v928
          %v935 = vunpack.c.l.b16 %v929
          %v936 = vpack.c.b16 %v935, %v934
          %v938 = vsel %vm384, %v936, 0
          %v941 = vsel %vm388, %v931, 0
          %943 = vmatprep.subr.bf16.mxu0 0
          %944 = vmatpush1.bf16.msra.mxu0 %v941
          %945 = vmatprep.subr.bf16.mxu0 0
          %946 = vmatpush1.bf16.msra.mxu0 0
          %947 = vmatprep.subr.bf16.mxu0 0
          %948 = vmatpush1.bf16.msra.mxu0 0
          %949 = vmatprep.subr.bf16.mxu0 0
          %950 = vmatpush1.bf16.msra.mxu0 0
          %951 = vmatprep.subr.bf16.mxu0 0
          %952 = vmatpush1.bf16.msra.mxu0 0
          %953 = vmatprep.subr.bf16.mxu0 0
          %954 = vmatpush1.bf16.msra.mxu0 0
          %955 = vmatprep.subr.bf16.mxu0 0
          %956 = vmatpush1.bf16.msra.mxu0 0
          %957 = vmatprep.subr.bf16.mxu0 0
          %958 = vmatpush1.bf16.msra.mxu0 0
          %959 = vmatprep.subr.bf16.mxu0 0
          %960 = vmatpush1.bf16.msra.mxu0 0
          %961 = vmatprep.subr.bf16.mxu0 0
          %962 = vmatpush1.bf16.msra.mxu0 0
          %963 = vmatprep.subr.bf16.mxu0 0
          %964 = vmatpush1.bf16.msra.mxu0 0
          %965 = vmatprep.subr.bf16.mxu0 0
          %966 = vmatpush1.bf16.msra.mxu0 0
          %967 = vmatprep.subr.bf16.mxu0 0
          %968 = vmatpush1.bf16.msra.mxu0 0
          %969 = vmatprep.subr.bf16.mxu0 0
          %970 = vmatpush1.bf16.msra.mxu0 0
          %971 = vmatprep.subr.bf16.mxu0 0
          %972 = vmatpush1.bf16.msra.mxu0 0
          %973 = vmatprep.subr.bf16.mxu0 0
          %974 = vmatpush1.bf16.msra.mxu0 0
          %975 = vmatprep.mubr.bf16.mxu0 0
          %976 = vmatmul.mubr.bf16.gmra.mrb[0].mxu0 %v938
          %v977 = vpop.f32.mrb[0].mxu0
          %v978 = vadd.f32 0.0, %v977
          %v979 = vpop.f32.mrb[0].mxu0
          %v980 = vpop.f32.mrb[0].mxu0
          %v981 = vadd.f32 0.0, %v980
          %v982 = vpop.f32.mrb[0].mxu0
          %983 = vdwg.mxu0
          %v984 = vadd.f32 %v924, %v978
          %v985 = vadd.f32 %v925, %v981
          %v986 = vld [vmem:[%s927] sm:$0xf]
          %v987 = vld [vmem:[%s927 + $0x4] sm:$0xf]
          %v988 = vld [vmem:[%s927 + $0x8] sm:$0x1]
          %s989 = scalar_lea.vmem %s3, 20
          %v990 = vld [vmem:[%s989] sm:$0x3]
          %v994 = vunpack.c.l.b16 %v986
          %v995 = vunpack.c.l.b16 %v987
          %v996 = vunpack.c.l.b16 %v988
          %v997 = vpack.c.b16 %v995, %v994
          %v998 = vpack.c.b16 %v996, %v996
          %v1000 = vshrl.u32 %v997, 16
          %v1002 = vshll.u32 %v997, 16
          %v1004 = vrot.slane %v1002, 1
          %v1005 = vor.u32 %v1000, %v1004
          %v1007 = vshll.u32 %v998, 16
          %v1009 = vrot.slane %v1007, 1
          %v1010 = vsel %vm371, %v1005, %v1009
          %v1012 = vsel %vm384, %v1010, 0
          %v1015 = vsel %vm388, %v990, 0
          %1017 = vmatprep.subr.bf16.mxu0 0
          %1018 = vmatpush1.bf16.msra.mxu0 %v1015
          %1019 = vmatprep.subr.bf16.mxu0 0
          %1020 = vmatpush1.bf16.msra.mxu0 0
          %1021 = vmatprep.subr.bf16.mxu0 0
          %1022 = vmatpush1.bf16.msra.mxu0 0
          %1023 = vmatprep.subr.bf16.mxu0 0
          %1024 = vmatpush1.bf16.msra.mxu0 0
          %1025 = vmatprep.subr.bf16.mxu0 0
          %1026 = vmatpush1.bf16.msra.mxu0 0
          %1027 = vmatprep.subr.bf16.mxu0 0
          %1028 = vmatpush1.bf16.msra.mxu0 0
          %1029 = vmatprep.subr.bf16.mxu0 0
          %1030 = vmatpush1.bf16.msra.mxu0 0
          %1031 = vmatprep.subr.bf16.mxu0 0
          %1032 = vmatpush1.bf16.msra.mxu0 0
          %1033 = vmatprep.subr.bf16.mxu0 0
          %1034 = vmatpush1.bf16.msra.mxu0 0
          %1035 = vmatprep.subr.bf16.mxu0 0
          %1036 = vmatpush1.bf16.msra.mxu0 0
          %1037 = vmatprep.subr.bf16.mxu0 0
          %1038 = vmatpush1.bf16.msra.mxu0 0
          %1039 = vmatprep.subr.bf16.mxu0 0
          %1040 = vmatpush1.bf16.msra.mxu0 0
          %1041 = vmatprep.subr.bf16.mxu0 0
          %1042 = vmatpush1.bf16.msra.mxu0 0
          %1043 = vmatprep.subr.bf16.mxu0 0
          %1044 = vmatpush1.bf16.msra.mxu0 0
          %1045 = vmatprep.subr.bf16.mxu0 0
          %1046 = vmatpush1.bf16.msra.mxu0 0
          %1047 = vmatprep.subr.bf16.mxu0 0
          %1048 = vmatpush1.bf16.msra.mxu0 0
          %1049 = vmatprep.mubr.bf16.mxu0 0
          %1050 = vmatmul.mubr.bf16.gmra.mrb[0].mxu0 %v1012
          %v1051 = vpop.f32.mrb[0].mxu0
          %v1052 = vadd.f32 0.0, %v1051
          %v1053 = vpop.f32.mrb[0].mxu0
          %v1054 = vpop.f32.mrb[0].mxu0
          %v1055 = vadd.f32 0.0, %v1054
          %v1056 = vpop.f32.mrb[0].mxu0
          %1057 = vdwg.mxu0
          %v1058 = vadd.f32 %v984, %v1052
          %v1059 = vadd.f32 %v985, %v1055
          %v1060 = vld [vmem:[%s927] sm:$0xe]
          %s1061 = scalar_lea.vmem %s3, 22
          %v1062 = vld [vmem:[%s1061] sm:$0x3]
          %v1064 = vunpack.c.l.b16 %v1060
          %v1065 = vpack.c.b16 %v995, %v1064
          %v1066 = vrot.slane %v1065, 1
          %v1067 = vrot.slane %v998, 1
          %v1068 = vsel %vm485, %v1066, %v1067
          %v1070 = vsel %vm384, %v1068, 0
          %v1073 = vsel %vm388, %v1062, 0
          %1075 = vmatprep.subr.bf16.mxu0 0
          %1076 = vmatpush1.bf16.msra.mxu0 %v1073
          %1077 = vmatprep.subr.bf16.mxu0 0
          %1078 = vmatpush1.bf16.msra.mxu0 0
          %1079 = vmatprep.subr.bf16.mxu0 0
          %1080 = vmatpush1.bf16.msra.mxu0 0
          %1081 = vmatprep.subr.bf16.mxu0 0
          %1082 = vmatpush1.bf16.msra.mxu0 0
          %1083 = vmatprep.subr.bf16.mxu0 0
          %1084 = vmatpush1.bf16.msra.mxu0 0
          %1085 = vmatprep.subr.bf16.mxu0 0
          %1086 = vmatpush1.bf16.msra.mxu0 0
          %1087 = vmatprep.subr.bf16.mxu0 0
          %1088 = vmatpush1.bf16.msra.mxu0 0
          %1089 = vmatprep.subr.bf16.mxu0 0
          %1090 = vmatpush1.bf16.msra.mxu0 0
          %1091 = vmatprep.subr.bf16.mxu0 0
          %1092 = vmatpush1.bf16.msra.mxu0 0
          %1093 = vmatprep.subr.bf16.mxu0 0
          %1094 = vmatpush1.bf16.msra.mxu0 0
          %1095 = vmatprep.subr.bf16.mxu0 0
          %1096 = vmatpush1.bf16.msra.mxu0 0
          %1097 = vmatprep.subr.bf16.mxu0 0
          %1098 = vmatpush1.bf16.msra.mxu0 0
          %1099 = vmatprep.subr.bf16.mxu0 0
          %1100 = vmatpush1.bf16.msra.mxu0 0
          %1101 = vmatprep.subr.bf16.mxu0 0
          %1102 = vmatpush1.bf16.msra.mxu0 0
          %1103 = vmatprep.subr.bf16.mxu0 0
          %1104 = vmatpush1.bf16.msra.mxu0 0
          %1105 = vmatprep.subr.bf16.mxu0 0
          %1106 = vmatpush1.bf16.msra.mxu0 0
          %1107 = vmatprep.mubr.bf16.mxu0 0
          %1108 = vmatmul.mubr.bf16.gmra.mrb[0].mxu0 %v1070
          %v1109 = vpop.f32.mrb[0].mxu0
          %v1110 = vadd.f32 0.0, %v1109
          %v1111 = vpop.f32.mrb[0].mxu0
          %v1112 = vpop.f32.mrb[0].mxu0
          %v1113 = vadd.f32 0.0, %v1112
          %v1114 = vpop.f32.mrb[0].mxu0
          %1115 = vdwg.mxu0
          %v1116 = vadd.f32 %v1058, %v1110
          %v1117 = vadd.f32 %v1059, %v1113
          %s1118 = smul.addr %s539, 4
          %s1119 = scalar_lea.vmem %s333, %s1118
          %v1120 = vld [vmem:[%s1119] sm:$0xf]
          %v1121 = vld [vmem:[%s1119 + $0x4] sm:$0xf]
          %s1122 = scalar_lea.vmem %s3, 24
          %v1123 = vld [vmem:[%s1122] sm:$0x3]
          %v1126 = vunpack.c.l.b16 %v1120
          %v1127 = vunpack.c.l.b16 %v1121
          %v1128 = vpack.c.b16 %v1127, %v1126
          %v1130 = vsel %vm384, %v1128, 0
          %v1133 = vsel %vm388, %v1123, 0
          %1135 = vmatprep.subr.bf16.mxu0 0
          %1136 = vmatpush1.bf16.msra.mxu0 %v1133
          %1137 = vmatprep.subr.bf16.mxu0 0
          %1138 = vmatpush1.bf16.msra.mxu0 0
          %1139 = vmatprep.subr.bf16.mxu0 0
          %1140 = vmatpush1.bf16.msra.mxu0 0
          %1141 = vmatprep.subr.bf16.mxu0 0
          %1142 = vmatpush1.bf16.msra.mxu0 0
          %1143 = vmatprep.subr.bf16.mxu0 0
          %1144 = vmatpush1.bf16.msra.mxu0 0
          %1145 = vmatprep.subr.bf16.mxu0 0
          %1146 = vmatpush1.bf16.msra.mxu0 0
          %1147 = vmatprep.subr.bf16.mxu0 0
          %1148 = vmatpush1.bf16.msra.mxu0 0
          %1149 = vmatprep.subr.bf16.mxu0 0
          %1150 = vmatpush1.bf16.msra.mxu0 0
          %1151 = vmatprep.subr.bf16.mxu0 0
          %1152 = vmatpush1.bf16.msra.mxu0 0
          %1153 = vmatprep.subr.bf16.mxu0 0
          %1154 = vmatpush1.bf16.msra.mxu0 0
          %1155 = vmatprep.subr.bf16.mxu0 0
          %1156 = vmatpush1.bf16.msra.mxu0 0
          %1157 = vmatprep.subr.bf16.mxu0 0
          %1158 = vmatpush1.bf16.msra.mxu0 0
          %1159 = vmatprep.subr.bf16.mxu0 0
          %1160 = vmatpush1.bf16.msra.mxu0 0
          %1161 = vmatprep.subr.bf16.mxu0 0
          %1162 = vmatpush1.bf16.msra.mxu0 0
          %1163 = vmatprep.subr.bf16.mxu0 0
          %1164 = vmatpush1.bf16.msra.mxu0 0
          %1165 = vmatprep.subr.bf16.mxu0 0
          %1166 = vmatpush1.bf16.msra.mxu0 0
          %1167 = vmatprep.mubr.bf16.mxu0 0
          %1168 = vmatmul.mubr.bf16.gmra.mrb[0].mxu0 %v1130
          %v1169 = vpop.f32.mrb[0].mxu0
          %v1170 = vadd.f32 0.0, %v1169
          %v1171 = vpop.f32.mrb[0].mxu0
          %v1172 = vpop.f32.mrb[0].mxu0
          %v1173 = vadd.f32 0.0, %v1172
          %v1174 = vpop.f32.mrb[0].mxu0
          %1175 = vdwg.mxu0
          %v1176 = vadd.f32 %v1116, %v1170
          %v1177 = vadd.f32 %v1117, %v1173
          %v1178 = vld [vmem:[%s1119] sm:$0xf]
          %v1179 = vld [vmem:[%s1119 + $0x4] sm:$0xf]
          %v1180 = vld [vmem:[%s1119 + $0x8] sm:$0x1]
          %s1181 = scalar_lea.vmem %s3, 26
          %v1182 = vld [vmem:[%s1181] sm:$0x3]
          %v1186 = vunpack.c.l.b16 %v1178
          %v1187 = vunpack.c.l.b16 %v1179
          %v1188 = vunpack.c.l.b16 %v1180
          %v1189 = vpack.c.b16 %v1187, %v1186
          %v1190 = vpack.c.b16 %v1188, %v1188
          %v1192 = vshrl.u32 %v1189, 16
          %v1194 = vshll.u32 %v1189, 16
          %v1196 = vrot.slane %v1194, 1
          %v1197 = vor.u32 %v1192, %v1196
          %v1199 = vshll.u32 %v1190, 16
          %v1201 = vrot.slane %v1199, 1
          %v1202 = vsel %vm371, %v1197, %v1201
          %v1204 = vsel %vm384, %v1202, 0
          %v1207 = vsel %vm388, %v1182, 0
          %1209 = vmatprep.subr.bf16.mxu0 0
          %1210 = vmatpush1.bf16.msra.mxu0 %v1207
          %1211 = vmatprep.subr.bf16.mxu0 0
          %1212 = vmatpush1.bf16.msra.mxu0 0
          %1213 = vmatprep.subr.bf16.mxu0 0
          %1214 = vmatpush1.bf16.msra.mxu0 0
          %1215 = vmatprep.subr.bf16.mxu0 0
          %1216 = vmatpush1.bf16.msra.mxu0 0
          %1217 = vmatprep.subr.bf16.mxu0 0
          %1218 = vmatpush1.bf16.msra.mxu0 0
          %1219 = vmatprep.subr.bf16.mxu0 0
          %1220 = vmatpush1.bf16.msra.mxu0 0
          %1221 = vmatprep.subr.bf16.mxu0 0
          %1222 = vmatpush1.bf16.msra.mxu0 0
          %1223 = vmatprep.subr.bf16.mxu0 0
          %1224 = vmatpush1.bf16.msra.mxu0 0
          %1225 = vmatprep.subr.bf16.mxu0 0
          %1226 = vmatpush1.bf16.msra.mxu0 0
          %1227 = vmatprep.subr.bf16.mxu0 0
          %1228 = vmatpush1.bf16.msra.mxu0 0
          %1229 = vmatprep.subr.bf16.mxu0 0
          %1230 = vmatpush1.bf16.msra.mxu0 0
          %1231 = vmatprep.subr.bf16.mxu0 0
          %1232 = vmatpush1.bf16.msra.mxu0 0
          %1233 = vmatprep.subr.bf16.mxu0 0
          %1234 = vmatpush1.bf16.msra.mxu0 0
          %1235 = vmatprep.subr.bf16.mxu0 0
          %1236 = vmatpush1.bf16.msra.mxu0 0
          %1237 = vmatprep.subr.bf16.mxu0 0
          %1238 = vmatpush1.bf16.msra.mxu0 0
          %1239 = vmatprep.subr.bf16.mxu0 0
          %1240 = vmatpush1.bf16.msra.mxu0 0
          %1241 = vmatprep.mubr.bf16.mxu0 0
          %1242 = vmatmul.mubr.bf16.gmra.mrb[0].mxu0 %v1204
          %v1243 = vpop.f32.mrb[0].mxu0
          %v1244 = vadd.f32 0.0, %v1243
          %v1245 = vpop.f32.mrb[0].mxu0
          %v1246 = vpop.f32.mrb[0].mxu0
          %v1247 = vadd.f32 0.0, %v1246
          %v1248 = vpop.f32.mrb[0].mxu0
          %1249 = vdwg.mxu0
          %v1250 = vadd.f32 %v1176, %v1244
          %v1251 = vadd.f32 %v1177, %v1247
          %v1252 = vld [vmem:[%s1119] sm:$0xe]
          %s1253 = scalar_lea.vmem %s3, 28
          %v1254 = vld [vmem:[%s1253] sm:$0x3]
          %v1256 = vunpack.c.l.b16 %v1252
          %v1257 = vpack.c.b16 %v1187, %v1256
          %v1258 = vrot.slane %v1257, 1
          %v1259 = vrot.slane %v1190, 1
          %v1260 = vsel %vm485, %v1258, %v1259
          %v1262 = vsel %vm384, %v1260, 0
          %v1265 = vsel %vm388, %v1254, 0
          %1267 = vmatprep.subr.bf16.mxu0 0
          %1268 = vmatpush1.bf16.msra.mxu0 %v1265
          %1269 = vmatprep.subr.bf16.mxu0 0
          %1270 = vmatpush1.bf16.msra.mxu0 0
          %1271 = vmatprep.subr.bf16.mxu0 0
          %1272 = vmatpush1.bf16.msra.mxu0 0
          %1273 = vmatprep.subr.bf16.mxu0 0
          %1274 = vmatpush1.bf16.msra.mxu0 0
          %1275 = vmatprep.subr.bf16.mxu0 0
          %1276 = vmatpush1.bf16.msra.mxu0 0
          %1277 = vmatprep.subr.bf16.mxu0 0
          %1278 = vmatpush1.bf16.msra.mxu0 0
          %1279 = vmatprep.subr.bf16.mxu0 0
          %1280 = vmatpush1.bf16.msra.mxu0 0
          %1281 = vmatprep.subr.bf16.mxu0 0
          %1282 = vmatpush1.bf16.msra.mxu0 0
          %1283 = vmatprep.subr.bf16.mxu0 0
          %1284 = vmatpush1.bf16.msra.mxu0 0
          %1285 = vmatprep.subr.bf16.mxu0 0
          %1286 = vmatpush1.bf16.msra.mxu0 0
          %1287 = vmatprep.subr.bf16.mxu0 0
          %1288 = vmatpush1.bf16.msra.mxu0 0
          %1289 = vmatprep.subr.bf16.mxu0 0
          %1290 = vmatpush1.bf16.msra.mxu0 0
          %1291 = vmatprep.subr.bf16.mxu0 0
          %1292 = vmatpush1.bf16.msra.mxu0 0
          %1293 = vmatprep.subr.bf16.mxu0 0
          %1294 = vmatpush1.bf16.msra.mxu0 0
          %1295 = vmatprep.subr.bf16.mxu0 0
          %1296 = vmatpush1.bf16.msra.mxu0 0
          %1297 = vmatprep.subr.bf16.mxu0 0
          %1298 = vmatpush1.bf16.msra.mxu0 0
          %1299 = vmatprep.mubr.bf16.mxu0 0
          %1300 = vmatmul.mubr.bf16.gmra.mrb[0].mxu0 %v1262
          %v1301 = vpop.f32.mrb[0].mxu0
          %v1302 = vadd.f32 0.0, %v1301
          %v1303 = vpop.f32.mrb[0].mxu0
          %v1304 = vpop.f32.mrb[0].mxu0
          %v1305 = vadd.f32 0.0, %v1304
          %v1306 = vpop.f32.mrb[0].mxu0
          %1307 = vdwg.mxu0
          %v1308 = vadd.f32 %v1250, %v1302
          %v1309 = vadd.f32 %v1251, %v1305
          %s1310 = smul.addr %s733, 4
          %s1311 = scalar_lea.vmem %s333, %s1310
          %v1312 = vld [vmem:[%s1311] sm:$0xf]
          %v1313 = vld [vmem:[%s1311 + $0x4] sm:$0xf]
          %s1314 = scalar_lea.vmem %s3, 30
          %v1315 = vld [vmem:[%s1314] sm:$0x3]
          %v1318 = vunpack.c.l.b16 %v1312
          %v1319 = vunpack.c.l.b16 %v1313
          %v1320 = vpack.c.b16 %v1319, %v1318
          %v1322 = vsel %vm384, %v1320, 0
          %v1325 = vsel %vm388, %v1315, 0
          %1327 = vmatprep.subr.bf16.mxu0 0
          %1328 = vmatpush1.bf16.msra.mxu0 %v1325
          %1329 = vmatprep.subr.bf16.mxu0 0
          %1330 = vmatpush1.bf16.msra.mxu0 0
          %1331 = vmatprep.subr.bf16.mxu0 0
          %1332 = vmatpush1.bf16.msra.mxu0 0
          %1333 = vmatprep.subr.bf16.mxu0 0
          %1334 = vmatpush1.bf16.msra.mxu0 0
          %1335 = vmatprep.subr.bf16.mxu0 0
          %1336 = vmatpush1.bf16.msra.mxu0 0
          %1337 = vmatprep.subr.bf16.mxu0 0
          %1338 = vmatpush1.bf16.msra.mxu0 0
          %1339 = vmatprep.subr.bf16.mxu0 0
          %1340 = vmatpush1.bf16.msra.mxu0 0
          %1341 = vmatprep.subr.bf16.mxu0 0
          %1342 = vmatpush1.bf16.msra.mxu0 0
          %1343 = vmatprep.subr.bf16.mxu0 0
          %1344 = vmatpush1.bf16.msra.mxu0 0
          %1345 = vmatprep.subr.bf16.mxu0 0
          %1346 = vmatpush1.bf16.msra.mxu0 0
          %1347 = vmatprep.subr.bf16.mxu0 0
          %1348 = vmatpush1.bf16.msra.mxu0 0
          %1349 = vmatprep.subr.bf16.mxu0 0
          %1350 = vmatpush1.bf16.msra.mxu0 0
          %1351 = vmatprep.subr.bf16.mxu0 0
          %1352 = vmatpush1.bf16.msra.mxu0 0
          %1353 = vmatprep.subr.bf16.mxu0 0
          %1354 = vmatpush1.bf16.msra.mxu0 0
          %1355 = vmatprep.subr.bf16.mxu0 0
          %1356 = vmatpush1.bf16.msra.mxu0 0
          %1357 = vmatprep.subr.bf16.mxu0 0
          %1358 = vmatpush1.bf16.msra.mxu0 0
          %1359 = vmatprep.mubr.bf16.mxu0 0
          %1360 = vmatmul.mubr.bf16.gmra.mrb[0].mxu0 %v1322
          %v1361 = vpop.f32.mrb[0].mxu0
          %v1362 = vadd.f32 0.0, %v1361
          %v1363 = vpop.f32.mrb[0].mxu0
          %v1364 = vpop.f32.mrb[0].mxu0
          %v1365 = vadd.f32 0.0, %v1364
          %v1366 = vpop.f32.mrb[0].mxu0
          %1367 = vdwg.mxu0
          %v1368 = vadd.f32 %v1308, %v1362
          %v1369 = vadd.f32 %v1309, %v1365
          %v1370 = vld [vmem:[%s1311] sm:$0xf]
          %v1371 = vld [vmem:[%s1311 + $0x4] sm:$0xf]
          %v1372 = vld [vmem:[%s1311 + $0x8] sm:$0x1]
          %s1373 = scalar_lea.vmem %s3, 32
          %v1374 = vld [vmem:[%s1373] sm:$0x3]
          %v1378 = vunpack.c.l.b16 %v1370
          %v1379 = vunpack.c.l.b16 %v1371
          %v1380 = vunpack.c.l.b16 %v1372
          %v1381 = vpack.c.b16 %v1379, %v1378
          %v1382 = vpack.c.b16 %v1380, %v1380
          %v1384 = vshrl.u32 %v1381, 16
          %v1386 = vshll.u32 %v1381, 16
          %v1388 = vrot.slane %v1386, 1
          %v1389 = vor.u32 %v1384, %v1388
          %v1391 = vshll.u32 %v1382, 16
          %v1393 = vrot.slane %v1391, 1
          %v1394 = vsel %vm371, %v1389, %v1393
          %v1396 = vsel %vm384, %v1394, 0
          %v1399 = vsel %vm388, %v1374, 0
          %1401 = vmatprep.subr.bf16.mxu0 0
          %1402 = vmatpush1.bf16.msra.mxu0 %v1399
          %1403 = vmatprep.subr.bf16.mxu0 0
          %1404 = vmatpush1.bf16.msra.mxu0 0
          %1405 = vmatprep.subr.bf16.mxu0 0
          %1406 = vmatpush1.bf16.msra.mxu0 0
          %1407 = vmatprep.subr.bf16.mxu0 0
          %1408 = vmatpush1.bf16.msra.mxu0 0
          %1409 = vmatprep.subr.bf16.mxu0 0
          %1410 = vmatpush1.bf16.msra.mxu0 0
          %1411 = vmatprep.subr.bf16.mxu0 0
          %1412 = vmatpush1.bf16.msra.mxu0 0
          %1413 = vmatprep.subr.bf16.mxu0 0
          %1414 = vmatpush1.bf16.msra.mxu0 0
          %1415 = vmatprep.subr.bf16.mxu0 0
          %1416 = vmatpush1.bf16.msra.mxu0 0
          %1417 = vmatprep.subr.bf16.mxu0 0
          %1418 = vmatpush1.bf16.msra.mxu0 0
          %1419 = vmatprep.subr.bf16.mxu0 0
          %1420 = vmatpush1.bf16.msra.mxu0 0
          %1421 = vmatprep.subr.bf16.mxu0 0
          %1422 = vmatpush1.bf16.msra.mxu0 0
          %1423 = vmatprep.subr.bf16.mxu0 0
          %1424 = vmatpush1.bf16.msra.mxu0 0
          %1425 = vmatprep.subr.bf16.mxu0 0
          %1426 = vmatpush1.bf16.msra.mxu0 0
          %1427 = vmatprep.subr.bf16.mxu0 0
          %1428 = vmatpush1.bf16.msra.mxu0 0
          %1429 = vmatprep.subr.bf16.mxu0 0
          %1430 = vmatpush1.bf16.msra.mxu0 0
          %1431 = vmatprep.subr.bf16.mxu0 0
          %1432 = vmatpush1.bf16.msra.mxu0 0
          %1433 = vmatprep.mubr.bf16.mxu0 0
          %1434 = vmatmul.mubr.bf16.gmra.mrb[0].mxu0 %v1396
          %v1435 = vpop.f32.mrb[0].mxu0
          %v1436 = vadd.f32 0.0, %v1435
          %v1437 = vpop.f32.mrb[0].mxu0
          %v1438 = vpop.f32.mrb[0].mxu0
          %v1439 = vadd.f32 0.0, %v1438
          %v1440 = vpop.f32.mrb[0].mxu0
          %1441 = vdwg.mxu0
          %v1442 = vadd.f32 %v1368, %v1436
          %v1443 = vadd.f32 %v1369, %v1439
          %v1444 = vld [vmem:[%s1311] sm:$0xe]
          %s1445 = scalar_lea.vmem %s3, 34
          %v1446 = vld [vmem:[%s1445] sm:$0x3]
          %v1448 = vunpack.c.l.b16 %v1444
          %v1449 = vpack.c.b16 %v1379, %v1448
          %v1450 = vrot.slane %v1449, 1
          %v1451 = vrot.slane %v1382, 1
          %v1452 = vsel %vm485, %v1450, %v1451
          %v1454 = vsel %vm384, %v1452, 0
          %v1457 = vsel %vm388, %v1446, 0
          %1459 = vmatprep.subr.bf16.mxu0 0
          %1460 = vmatpush1.bf16.msra.mxu0 %v1457
          %1461 = vmatprep.subr.bf16.mxu0 0
          %1462 = vmatpush1.bf16.msra.mxu0 0
          %1463 = vmatprep.subr.bf16.mxu0 0
          %1464 = vmatpush1.bf16.msra.mxu0 0
          %1465 = vmatprep.subr.bf16.mxu0 0
          %1466 = vmatpush1.bf16.msra.mxu0 0
          %1467 = vmatprep.subr.bf16.mxu0 0
          %1468 = vmatpush1.bf16.msra.mxu0 0
          %1469 = vmatprep.subr.bf16.mxu0 0
          %1470 = vmatpush1.bf16.msra.mxu0 0
          %1471 = vmatprep.subr.bf16.mxu0 0
          %1472 = vmatpush1.bf16.msra.mxu0 0
          %1473 = vmatprep.subr.bf16.mxu0 0
          %1474 = vmatpush1.bf16.msra.mxu0 0
          %1475 = vmatprep.subr.bf16.mxu0 0
          %1476 = vmatpush1.bf16.msra.mxu0 0
          %1477 = vmatprep.subr.bf16.mxu0 0
          %1478 = vmatpush1.bf16.msra.mxu0 0
          %1479 = vmatprep.subr.bf16.mxu0 0
          %1480 = vmatpush1.bf16.msra.mxu0 0
          %1481 = vmatprep.subr.bf16.mxu0 0
          %1482 = vmatpush1.bf16.msra.mxu0 0
          %1483 = vmatprep.subr.bf16.mxu0 0
          %1484 = vmatpush1.bf16.msra.mxu0 0
          %1485 = vmatprep.subr.bf16.mxu0 0
          %1486 = vmatpush1.bf16.msra.mxu0 0
          %1487 = vmatprep.subr.bf16.mxu0 0
          %1488 = vmatpush1.bf16.msra.mxu0 0
          %1489 = vmatprep.subr.bf16.mxu0 0
          %1490 = vmatpush1.bf16.msra.mxu0 0
          %1491 = vmatprep.mubr.bf16.mxu0 0
          %1492 = vmatmul.mubr.bf16.gmra.mrb[0].mxu0 %v1454
          %v1493 = vpop.f32.mrb[0].mxu0
          %v1494 = vadd.f32 0.0, %v1493
          %v1495 = vpop.f32.mrb[0].mxu0
          %v1496 = vpop.f32.mrb[0].mxu0
          %v1497 = vadd.f32 0.0, %v1496
          %v1498 = vpop.f32.mrb[0].mxu0
          %1499 = vdwg.mxu0
          %v1500 = vadd.f32 %v1442, %v1494
          %v1501 = vadd.f32 %v1443, %v1497
          %s1502 = smul.addr %s354, 4
          %s1503 = scalar_lea.vmem %s344, %s1502
          %v1504 = vld [vmem:[%s1503] sm:$0xf]
          %v1505 = vld [vmem:[%s1503 + $0x4] sm:$0xf]
          %s1506 = scalar_lea.vmem %s3, 36
          %v1507 = vld [vmem:[%s1506] sm:$0x3]
          %v1510 = vunpack.c.l.b16 %v1504
          %v1511 = vunpack.c.l.b16 %v1505
          %v1512 = vpack.c.b16 %v1511, %v1510
          %v1514 = vsel %vm384, %v1512, 0
          %v1517 = vsel %vm388, %v1507, 0
          %1519 = vmatprep.subr.bf16.mxu0 0
          %1520 = vmatpush1.bf16.msra.mxu0 %v1517
          %1521 = vmatprep.subr.bf16.mxu0 0
          %1522 = vmatpush1.bf16.msra.mxu0 0
          %1523 = vmatprep.subr.bf16.mxu0 0
          %1524 = vmatpush1.bf16.msra.mxu0 0
          %1525 = vmatprep.subr.bf16.mxu0 0
          %1526 = vmatpush1.bf16.msra.mxu0 0
          %1527 = vmatprep.subr.bf16.mxu0 0
          %1528 = vmatpush1.bf16.msra.mxu0 0
          %1529 = vmatprep.subr.bf16.mxu0 0
          %1530 = vmatpush1.bf16.msra.mxu0 0
          %1531 = vmatprep.subr.bf16.mxu0 0
          %1532 = vmatpush1.bf16.msra.mxu0 0
          %1533 = vmatprep.subr.bf16.mxu0 0
          %1534 = vmatpush1.bf16.msra.mxu0 0
          %1535 = vmatprep.subr.bf16.mxu0 0
          %1536 = vmatpush1.bf16.msra.mxu0 0
          %1537 = vmatprep.subr.bf16.mxu0 0
          %1538 = vmatpush1.bf16.msra.mxu0 0
          %1539 = vmatprep.subr.bf16.mxu0 0
          %1540 = vmatpush1.bf16.msra.mxu0 0
          %1541 = vmatprep.subr.bf16.mxu0 0
          %1542 = vmatpush1.bf16.msra.mxu0 0
          %1543 = vmatprep.subr.bf16.mxu0 0
          %1544 = vmatpush1.bf16.msra.mxu0 0
          %1545 = vmatprep.subr.bf16.mxu0 0
          %1546 = vmatpush1.bf16.msra.mxu0 0
          %1547 = vmatprep.subr.bf16.mxu0 0
          %1548 = vmatpush1.bf16.msra.mxu0 0
          %1549 = vmatprep.subr.bf16.mxu0 0
          %1550 = vmatpush1.bf16.msra.mxu0 0
          %1551 = vmatprep.mubr.bf16.mxu0 0
          %1552 = vmatmul.mubr.bf16.gmra.mrb[0].mxu0 %v1514
          %v1553 = vpop.f32.mrb[0].mxu0
          %v1554 = vadd.f32 0.0, %v1553
          %v1555 = vpop.f32.mrb[0].mxu0
          %v1556 = vpop.f32.mrb[0].mxu0
          %v1557 = vadd.f32 0.0, %v1556
          %v1558 = vpop.f32.mrb[0].mxu0
          %1559 = vdwg.mxu0
          %v1560 = vadd.f32 %v1500, %v1554
          %v1561 = vadd.f32 %v1501, %v1557
          %v1562 = vld [vmem:[%s1503] sm:$0xf]
          %v1563 = vld [vmem:[%s1503 + $0x4] sm:$0xf]
          %v1564 = vld [vmem:[%s1503 + $0x8] sm:$0x1]
          %s1565 = scalar_lea.vmem %s3, 38
          %v1566 = vld [vmem:[%s1565] sm:$0x3]
          %v1570 = vunpack.c.l.b16 %v1562
          %v1571 = vunpack.c.l.b16 %v1563
          %v1572 = vunpack.c.l.b16 %v1564
          %v1573 = vpack.c.b16 %v1571, %v1570
          %v1574 = vpack.c.b16 %v1572, %v1572
          %v1576 = vshrl.u32 %v1573, 16
          %v1578 = vshll.u32 %v1573, 16
          %v1580 = vrot.slane %v1578, 1
          %v1581 = vor.u32 %v1576, %v1580
          %v1583 = vshll.u32 %v1574, 16
          %v1585 = vrot.slane %v1583, 1
          %v1586 = vsel %vm371, %v1581, %v1585
          %v1588 = vsel %vm384, %v1586, 0
          %v1591 = vsel %vm388, %v1566, 0
          %1593 = vmatprep.subr.bf16.mxu0 0
          %1594 = vmatpush1.bf16.msra.mxu0 %v1591
          %1595 = vmatprep.subr.bf16.mxu0 0
          %1596 = vmatpush1.bf16.msra.mxu0 0
          %1597 = vmatprep.subr.bf16.mxu0 0
          %1598 = vmatpush1.bf16.msra.mxu0 0
          %1599 = vmatprep.subr.bf16.mxu0 0
          %1600 = vmatpush1.bf16.msra.mxu0 0
          %1601 = vmatprep.subr.bf16.mxu0 0
          %1602 = vmatpush1.bf16.msra.mxu0 0
          %1603 = vmatprep.subr.bf16.mxu0 0
          %1604 = vmatpush1.bf16.msra.mxu0 0
          %1605 = vmatprep.subr.bf16.mxu0 0
          %1606 = vmatpush1.bf16.msra.mxu0 0
          %1607 = vmatprep.subr.bf16.mxu0 0
          %1608 = vmatpush1.bf16.msra.mxu0 0
          %1609 = vmatprep.subr.bf16.mxu0 0
          %1610 = vmatpush1.bf16.msra.mxu0 0
          %1611 = vmatprep.subr.bf16.mxu0 0
          %1612 = vmatpush1.bf16.msra.mxu0 0
          %1613 = vmatprep.subr.bf16.mxu0 0
          %1614 = vmatpush1.bf16.msra.mxu0 0
          %1615 = vmatprep.subr.bf16.mxu0 0
          %1616 = vmatpush1.bf16.msra.mxu0 0
          %1617 = vmatprep.subr.bf16.mxu0 0
          %1618 = vmatpush1.bf16.msra.mxu0 0
          %1619 = vmatprep.subr.bf16.mxu0 0
          %1620 = vmatpush1.bf16.msra.mxu0 0
          %1621 = vmatprep.subr.bf16.mxu0 0
          %1622 = vmatpush1.bf16.msra.mxu0 0
          %1623 = vmatprep.subr.bf16.mxu0 0
          %1624 = vmatpush1.bf16.msra.mxu0 0
          %1625 = vmatprep.mubr.bf16.mxu0 0
          %1626 = vmatmul.mubr.bf16.gmra.mrb[0].mxu0 %v1588
          %v1627 = vpop.f32.mrb[0].mxu0
          %v1628 = vadd.f32 0.0, %v1627
          %v1629 = vpop.f32.mrb[0].mxu0
          %v1630 = vpop.f32.mrb[0].mxu0
          %v1631 = vadd.f32 0.0, %v1630
          %v1632 = vpop.f32.mrb[0].mxu0
          %1633 = vdwg.mxu0
          %v1634 = vadd.f32 %v1560, %v1628
          %v1635 = vadd.f32 %v1561, %v1631
          %v1636 = vld [vmem:[%s1503] sm:$0xe]
          %s1637 = scalar_lea.vmem %s3, 40
          %v1638 = vld [vmem:[%s1637] sm:$0x3]
          %v1640 = vunpack.c.l.b16 %v1636
          %v1641 = vpack.c.b16 %v1571, %v1640
          %v1642 = vrot.slane %v1641, 1
          %v1643 = vrot.slane %v1574, 1
          %v1644 = vsel %vm485, %v1642, %v1643
          %v1646 = vsel %vm384, %v1644, 0
          %v1649 = vsel %vm388, %v1638, 0
          %1651 = vmatprep.subr.bf16.mxu0 0
          %1652 = vmatpush1.bf16.msra.mxu0 %v1649
          %1653 = vmatprep.subr.bf16.mxu0 0
          %1654 = vmatpush1.bf16.msra.mxu0 0
          %1655 = vmatprep.subr.bf16.mxu0 0
          %1656 = vmatpush1.bf16.msra.mxu0 0
          %1657 = vmatprep.subr.bf16.mxu0 0
          %1658 = vmatpush1.bf16.msra.mxu0 0
          %1659 = vmatprep.subr.bf16.mxu0 0
          %1660 = vmatpush1.bf16.msra.mxu0 0
          %1661 = vmatprep.subr.bf16.mxu0 0
          %1662 = vmatpush1.bf16.msra.mxu0 0
          %1663 = vmatprep.subr.bf16.mxu0 0
          %1664 = vmatpush1.bf16.msra.mxu0 0
          %1665 = vmatprep.subr.bf16.mxu0 0
          %1666 = vmatpush1.bf16.msra.mxu0 0
          %1667 = vmatprep.subr.bf16.mxu0 0
          %1668 = vmatpush1.bf16.msra.mxu0 0
          %1669 = vmatprep.subr.bf16.mxu0 0
          %1670 = vmatpush1.bf16.msra.mxu0 0
          %1671 = vmatprep.subr.bf16.mxu0 0
          %1672 = vmatpush1.bf16.msra.mxu0 0
          %1673 = vmatprep.subr.bf16.mxu0 0
          %1674 = vmatpush1.bf16.msra.mxu0 0
          %1675 = vmatprep.subr.bf16.mxu0 0
          %1676 = vmatpush1.bf16.msra.mxu0 0
          %1677 = vmatprep.subr.bf16.mxu0 0
          %1678 = vmatpush1.bf16.msra.mxu0 0
          %1679 = vmatprep.subr.bf16.mxu0 0
          %1680 = vmatpush1.bf16.msra.mxu0 0
          %1681 = vmatprep.subr.bf16.mxu0 0
          %1682 = vmatpush1.bf16.msra.mxu0 0
          %1683 = vmatprep.mubr.bf16.mxu0 0
          %1684 = vmatmul.mubr.bf16.gmra.mrb[0].mxu0 %v1646
          %v1685 = vpop.f32.mrb[0].mxu0
          %v1686 = vadd.f32 0.0, %v1685
          %v1687 = vpop.f32.mrb[0].mxu0
          %v1688 = vpop.f32.mrb[0].mxu0
          %v1689 = vadd.f32 0.0, %v1688
          %v1690 = vpop.f32.mrb[0].mxu0
          %1691 = vdwg.mxu0
          %v1692 = vadd.f32 %v1634, %v1686
          %v1693 = vadd.f32 %v1635, %v1689
          %s1694 = smul.addr %s539, 4
          %s1695 = scalar_lea.vmem %s344, %s1694
          %v1696 = vld [vmem:[%s1695] sm:$0xf]
          %v1697 = vld [vmem:[%s1695 + $0x4] sm:$0xf]
          %s1698 = scalar_lea.vmem %s3, 42
          %v1699 = vld [vmem:[%s1698] sm:$0x3]
          %v1702 = vunpack.c.l.b16 %v1696
          %v1703 = vunpack.c.l.b16 %v1697
          %v1704 = vpack.c.b16 %v1703, %v1702
          %v1706 = vsel %vm384, %v1704, 0
          %v1709 = vsel %vm388, %v1699, 0
          %1711 = vmatprep.subr.bf16.mxu0 0
          %1712 = vmatpush1.bf16.msra.mxu0 %v1709
          %1713 = vmatprep.subr.bf16.mxu0 0
          %1714 = vmatpush1.bf16.msra.mxu0 0
          %1715 = vmatprep.subr.bf16.mxu0 0
          %1716 = vmatpush1.bf16.msra.mxu0 0
          %1717 = vmatprep.subr.bf16.mxu0 0
          %1718 = vmatpush1.bf16.msra.mxu0 0
          %1719 = vmatprep.subr.bf16.mxu0 0
          %1720 = vmatpush1.bf16.msra.mxu0 0
          %1721 = vmatprep.subr.bf16.mxu0 0
          %1722 = vmatpush1.bf16.msra.mxu0 0
          %1723 = vmatprep.subr.bf16.mxu0 0
          %1724 = vmatpush1.bf16.msra.mxu0 0
          %1725 = vmatprep.subr.bf16.mxu0 0
          %1726 = vmatpush1.bf16.msra.mxu0 0
          %1727 = vmatprep.subr.bf16.mxu0 0
          %1728 = vmatpush1.bf16.msra.mxu0 0
          %1729 = vmatprep.subr.bf16.mxu0 0
          %1730 = vmatpush1.bf16.msra.mxu0 0
          %1731 = vmatprep.subr.bf16.mxu0 0
          %1732 = vmatpush1.bf16.msra.mxu0 0
          %1733 = vmatprep.subr.bf16.mxu0 0
          %1734 = vmatpush1.bf16.msra.mxu0 0
          %1735 = vmatprep.subr.bf16.mxu0 0
          %1736 = vmatpush1.bf16.msra.mxu0 0
          %1737 = vmatprep.subr.bf16.mxu0 0
          %1738 = vmatpush1.bf16.msra.mxu0 0
          %1739 = vmatprep.subr.bf16.mxu0 0
          %1740 = vmatpush1.bf16.msra.mxu0 0
          %1741 = vmatprep.subr.bf16.mxu0 0
          %1742 = vmatpush1.bf16.msra.mxu0 0
          %1743 = vmatprep.mubr.bf16.mxu0 0
          %1744 = vmatmul.mubr.bf16.gmra.mrb[0].mxu0 %v1706
          %v1745 = vpop.f32.mrb[0].mxu0
          %v1746 = vadd.f32 0.0, %v1745
          %v1747 = vpop.f32.mrb[0].mxu0
          %v1748 = vpop.f32.mrb[0].mxu0
          %v1749 = vadd.f32 0.0, %v1748
          %v1750 = vpop.f32.mrb[0].mxu0
          %1751 = vdwg.mxu0
          %v1752 = vadd.f32 %v1692, %v1746
          %v1753 = vadd.f32 %v1693, %v1749
          %v1754 = vld [vmem:[%s1695] sm:$0xf]
          %v1755 = vld [vmem:[%s1695 + $0x4] sm:$0xf]
          %v1756 = vld [vmem:[%s1695 + $0x8] sm:$0x1]
          %s1757 = scalar_lea.vmem %s3, 44
          %v1758 = vld [vmem:[%s1757] sm:$0x3]
          %v1762 = vunpack.c.l.b16 %v1754
          %v1763 = vunpack.c.l.b16 %v1755
          %v1764 = vunpack.c.l.b16 %v1756
          %v1765 = vpack.c.b16 %v1763, %v1762
          %v1766 = vpack.c.b16 %v1764, %v1764
          %v1768 = vshrl.u32 %v1765, 16
          %v1770 = vshll.u32 %v1765, 16
          %v1772 = vrot.slane %v1770, 1
          %v1773 = vor.u32 %v1768, %v1772
          %v1775 = vshll.u32 %v1766, 16
          %v1777 = vrot.slane %v1775, 1
          %v1778 = vsel %vm371, %v1773, %v1777
          %v1780 = vsel %vm384, %v1778, 0
          %v1783 = vsel %vm388, %v1758, 0
          %1785 = vmatprep.subr.bf16.mxu0 0
          %1786 = vmatpush1.bf16.msra.mxu0 %v1783
          %1787 = vmatprep.subr.bf16.mxu0 0
          %1788 = vmatpush1.bf16.msra.mxu0 0
          %1789 = vmatprep.subr.bf16.mxu0 0
          %1790 = vmatpush1.bf16.msra.mxu0 0
          %1791 = vmatprep.subr.bf16.mxu0 0
          %1792 = vmatpush1.bf16.msra.mxu0 0
          %1793 = vmatprep.subr.bf16.mxu0 0
          %1794 = vmatpush1.bf16.msra.mxu0 0
          %1795 = vmatprep.subr.bf16.mxu0 0
          %1796 = vmatpush1.bf16.msra.mxu0 0
          %1797 = vmatprep.subr.bf16.mxu0 0
          %1798 = vmatpush1.bf16.msra.mxu0 0
          %1799 = vmatprep.subr.bf16.mxu0 0
          %1800 = vmatpush1.bf16.msra.mxu0 0
          %1801 = vmatprep.subr.bf16.mxu0 0
          %1802 = vmatpush1.bf16.msra.mxu0 0
          %1803 = vmatprep.subr.bf16.mxu0 0
          %1804 = vmatpush1.bf16.msra.mxu0 0
          %1805 = vmatprep.subr.bf16.mxu0 0
          %1806 = vmatpush1.bf16.msra.mxu0 0
          %1807 = vmatprep.subr.bf16.mxu0 0
          %1808 = vmatpush1.bf16.msra.mxu0 0
          %1809 = vmatprep.subr.bf16.mxu0 0
          %1810 = vmatpush1.bf16.msra.mxu0 0
          %1811 = vmatprep.subr.bf16.mxu0 0
          %1812 = vmatpush1.bf16.msra.mxu0 0
          %1813 = vmatprep.subr.bf16.mxu0 0
          %1814 = vmatpush1.bf16.msra.mxu0 0
          %1815 = vmatprep.subr.bf16.mxu0 0
          %1816 = vmatpush1.bf16.msra.mxu0 0
          %1817 = vmatprep.mubr.bf16.mxu0 0
          %1818 = vmatmul.mubr.bf16.gmra.mrb[0].mxu0 %v1780
          %v1819 = vpop.f32.mrb[0].mxu0
          %v1820 = vadd.f32 0.0, %v1819
          %v1821 = vpop.f32.mrb[0].mxu0
          %v1822 = vpop.f32.mrb[0].mxu0
          %v1823 = vadd.f32 0.0, %v1822
          %v1824 = vpop.f32.mrb[0].mxu0
          %1825 = vdwg.mxu0
          %v1826 = vadd.f32 %v1752, %v1820
          %v1827 = vadd.f32 %v1753, %v1823
          %v1828 = vld [vmem:[%s1695] sm:$0xe]
          %s1829 = scalar_lea.vmem %s3, 46
          %v1830 = vld [vmem:[%s1829] sm:$0x3]
          %v1832 = vunpack.c.l.b16 %v1828
          %v1833 = vpack.c.b16 %v1763, %v1832
          %v1834 = vrot.slane %v1833, 1
          %v1835 = vrot.slane %v1766, 1
          %v1836 = vsel %vm485, %v1834, %v1835
          %v1838 = vsel %vm384, %v1836, 0
          %v1841 = vsel %vm388, %v1830, 0
          %1843 = vmatprep.subr.bf16.mxu0 0
          %1844 = vmatpush1.bf16.msra.mxu0 %v1841
          %1845 = vmatprep.subr.bf16.mxu0 0
          %1846 = vmatpush1.bf16.msra.mxu0 0
          %1847 = vmatprep.subr.bf16.mxu0 0
          %1848 = vmatpush1.bf16.msra.mxu0 0
          %1849 = vmatprep.subr.bf16.mxu0 0
          %1850 = vmatpush1.bf16.msra.mxu0 0
          %1851 = vmatprep.subr.bf16.mxu0 0
          %1852 = vmatpush1.bf16.msra.mxu0 0
          %1853 = vmatprep.subr.bf16.mxu0 0
          %1854 = vmatpush1.bf16.msra.mxu0 0
          %1855 = vmatprep.subr.bf16.mxu0 0
          %1856 = vmatpush1.bf16.msra.mxu0 0
          %1857 = vmatprep.subr.bf16.mxu0 0
          %1858 = vmatpush1.bf16.msra.mxu0 0
          %1859 = vmatprep.subr.bf16.mxu0 0
          %1860 = vmatpush1.bf16.msra.mxu0 0
          %1861 = vmatprep.subr.bf16.mxu0 0
          %1862 = vmatpush1.bf16.msra.mxu0 0
          %1863 = vmatprep.subr.bf16.mxu0 0
          %1864 = vmatpush1.bf16.msra.mxu0 0
          %1865 = vmatprep.subr.bf16.mxu0 0
          %1866 = vmatpush1.bf16.msra.mxu0 0
          %1867 = vmatprep.subr.bf16.mxu0 0
          %1868 = vmatpush1.bf16.msra.mxu0 0
          %1869 = vmatprep.subr.bf16.mxu0 0
          %1870 = vmatpush1.bf16.msra.mxu0 0
          %1871 = vmatprep.subr.bf16.mxu0 0
          %1872 = vmatpush1.bf16.msra.mxu0 0
          %1873 = vmatprep.subr.bf16.mxu0 0
          %1874 = vmatpush1.bf16.msra.mxu0 0
          %1875 = vmatprep.mubr.bf16.mxu0 0
          %1876 = vmatmul.mubr.bf16.gmra.mrb[0].mxu0 %v1838
          %v1877 = vpop.f32.mrb[0].mxu0
          %v1878 = vadd.f32 0.0, %v1877
          %v1879 = vpop.f32.mrb[0].mxu0
          %v1880 = vpop.f32.mrb[0].mxu0
          %v1881 = vadd.f32 0.0, %v1880
          %v1882 = vpop.f32.mrb[0].mxu0
          %1883 = vdwg.mxu0
          %v1884 = vadd.f32 %v1826, %v1878
          %v1885 = vadd.f32 %v1827, %v1881
          %s1886 = smul.addr %s733, 4
          %s1887 = scalar_lea.vmem %s344, %s1886
          %v1888 = vld [vmem:[%s1887] sm:$0xf]
          %v1889 = vld [vmem:[%s1887 + $0x4] sm:$0xf]
          %s1890 = scalar_lea.vmem %s3, 48
          %v1891 = vld [vmem:[%s1890] sm:$0x3]
          %v1894 = vunpack.c.l.b16 %v1888
          %v1895 = vunpack.c.l.b16 %v1889
          %v1896 = vpack.c.b16 %v1895, %v1894
          %v1898 = vsel %vm384, %v1896, 0
          %v1901 = vsel %vm388, %v1891, 0
          %1903 = vmatprep.subr.bf16.mxu0 0
          %1904 = vmatpush1.bf16.msra.mxu0 %v1901
          %1905 = vmatprep.subr.bf16.mxu0 0
          %1906 = vmatpush1.bf16.msra.mxu0 0
          %1907 = vmatprep.subr.bf16.mxu0 0
          %1908 = vmatpush1.bf16.msra.mxu0 0
          %1909 = vmatprep.subr.bf16.mxu0 0
          %1910 = vmatpush1.bf16.msra.mxu0 0
          %1911 = vmatprep.subr.bf16.mxu0 0
          %1912 = vmatpush1.bf16.msra.mxu0 0
          %1913 = vmatprep.subr.bf16.mxu0 0
          %1914 = vmatpush1.bf16.msra.mxu0 0
          %1915 = vmatprep.subr.bf16.mxu0 0
          %1916 = vmatpush1.bf16.msra.mxu0 0
          %1917 = vmatprep.subr.bf16.mxu0 0
          %1918 = vmatpush1.bf16.msra.mxu0 0
          %1919 = vmatprep.subr.bf16.mxu0 0
          %1920 = vmatpush1.bf16.msra.mxu0 0
          %1921 = vmatprep.subr.bf16.mxu0 0
          %1922 = vmatpush1.bf16.msra.mxu0 0
          %1923 = vmatprep.subr.bf16.mxu0 0
          %1924 = vmatpush1.bf16.msra.mxu0 0
          %1925 = vmatprep.subr.bf16.mxu0 0
          %1926 = vmatpush1.bf16.msra.mxu0 0
          %1927 = vmatprep.subr.bf16.mxu0 0
          %1928 = vmatpush1.bf16.msra.mxu0 0
          %1929 = vmatprep.subr.bf16.mxu0 0
          %1930 = vmatpush1.bf16.msra.mxu0 0
          %1931 = vmatprep.subr.bf16.mxu0 0
          %1932 = vmatpush1.bf16.msra.mxu0 0
          %1933 = vmatprep.subr.bf16.mxu0 0
          %1934 = vmatpush1.bf16.msra.mxu0 0
          %1935 = vmatprep.mubr.bf16.mxu0 0
          %1936 = vmatmul.mubr.bf16.gmra.mrb[0].mxu0 %v1898
          %v1937 = vpop.f32.mrb[0].mxu0
          %v1938 = vadd.f32 0.0, %v1937
          %v1939 = vpop.f32.mrb[0].mxu0
          %v1940 = vpop.f32.mrb[0].mxu0
          %v1941 = vadd.f32 0.0, %v1940
          %v1942 = vpop.f32.mrb[0].mxu0
          %1943 = vdwg.mxu0
          %v1944 = vadd.f32 %v1884, %v1938
          %v1945 = vadd.f32 %v1885, %v1941
          %v1946 = vld [vmem:[%s1887] sm:$0xf]
          %v1947 = vld [vmem:[%s1887 + $0x4] sm:$0xf]
          %v1948 = vld [vmem:[%s1887 + $0x8] sm:$0x1]
          %s1949 = scalar_lea.vmem %s3, 50
          %v1950 = vld [vmem:[%s1949] sm:$0x3]
          %v1954 = vunpack.c.l.b16 %v1946
          %v1955 = vunpack.c.l.b16 %v1947
          %v1956 = vunpack.c.l.b16 %v1948
          %v1957 = vpack.c.b16 %v1955, %v1954
          %v1958 = vpack.c.b16 %v1956, %v1956
          %v1960 = vshrl.u32 %v1957, 16
          %v1962 = vshll.u32 %v1957, 16
          %v1964 = vrot.slane %v1962, 1
          %v1965 = vor.u32 %v1960, %v1964
          %v1967 = vshll.u32 %v1958, 16
          %v1969 = vrot.slane %v1967, 1
          %v1970 = vsel %vm371, %v1965, %v1969
          %v1972 = vsel %vm384, %v1970, 0
          %v1975 = vsel %vm388, %v1950, 0
          %1977 = vmatprep.subr.bf16.mxu0 0
          %1978 = vmatpush1.bf16.msra.mxu0 %v1975
          %1979 = vmatprep.subr.bf16.mxu0 0
          %1980 = vmatpush1.bf16.msra.mxu0 0
          %1981 = vmatprep.subr.bf16.mxu0 0
          %1982 = vmatpush1.bf16.msra.mxu0 0
          %1983 = vmatprep.subr.bf16.mxu0 0
          %1984 = vmatpush1.bf16.msra.mxu0 0
          %1985 = vmatprep.subr.bf16.mxu0 0
          %1986 = vmatpush1.bf16.msra.mxu0 0
          %1987 = vmatprep.subr.bf16.mxu0 0
          %1988 = vmatpush1.bf16.msra.mxu0 0
          %1989 = vmatprep.subr.bf16.mxu0 0
          %1990 = vmatpush1.bf16.msra.mxu0 0
          %1991 = vmatprep.subr.bf16.mxu0 0
          %1992 = vmatpush1.bf16.msra.mxu0 0
          %1993 = vmatprep.subr.bf16.mxu0 0
          %1994 = vmatpush1.bf16.msra.mxu0 0
          %1995 = vmatprep.subr.bf16.mxu0 0
          %1996 = vmatpush1.bf16.msra.mxu0 0
          %1997 = vmatprep.subr.bf16.mxu0 0
          %1998 = vmatpush1.bf16.msra.mxu0 0
          %1999 = vmatprep.subr.bf16.mxu0 0
          %2000 = vmatpush1.bf16.msra.mxu0 0
          %2001 = vmatprep.subr.bf16.mxu0 0
          %2002 = vmatpush1.bf16.msra.mxu0 0
          %2003 = vmatprep.subr.bf16.mxu0 0
          %2004 = vmatpush1.bf16.msra.mxu0 0
          %2005 = vmatprep.subr.bf16.mxu0 0
          %2006 = vmatpush1.bf16.msra.mxu0 0
          %2007 = vmatprep.subr.bf16.mxu0 0
          %2008 = vmatpush1.bf16.msra.mxu0 0
          %2009 = vmatprep.mubr.bf16.mxu0 0
          %2010 = vmatmul.mubr.bf16.gmra.mrb[0].mxu0 %v1972
          %v2011 = vpop.f32.mrb[0].mxu0
          %v2012 = vadd.f32 0.0, %v2011
          %v2013 = vpop.f32.mrb[0].mxu0
          %v2014 = vpop.f32.mrb[0].mxu0
          %v2015 = vadd.f32 0.0, %v2014
          %v2016 = vpop.f32.mrb[0].mxu0
          %2017 = vdwg.mxu0
          %v2018 = vadd.f32 %v1944, %v2012
          %v2019 = vadd.f32 %v1945, %v2015
          %v2020 = vld [vmem:[%s1887] sm:$0xe]
          %s2021 = scalar_lea.vmem %s3, 52
          %v2022 = vld [vmem:[%s2021] sm:$0x3]
          %v2024 = vunpack.c.l.b16 %v2020
          %v2025 = vpack.c.b16 %v1955, %v2024
          %v2026 = vrot.slane %v2025, 1
          %v2027 = vrot.slane %v1958, 1
          %v2028 = vsel %vm485, %v2026, %v2027
          %v2030 = vsel %vm384, %v2028, 0
          %v2033 = vsel %vm388, %v2022, 0
          %2035 = vmatprep.subr.bf16.mxu0 0
          %2036 = vmatpush1.bf16.msra.mxu0 %v2033
          %2037 = vmatprep.subr.bf16.mxu0 0
          %2038 = vmatpush1.bf16.msra.mxu0 0
          %2039 = vmatprep.subr.bf16.mxu0 0
          %2040 = vmatpush1.bf16.msra.mxu0 0
          %2041 = vmatprep.subr.bf16.mxu0 0
          %2042 = vmatpush1.bf16.msra.mxu0 0
          %2043 = vmatprep.subr.bf16.mxu0 0
          %2044 = vmatpush1.bf16.msra.mxu0 0
          %2045 = vmatprep.subr.bf16.mxu0 0
          %2046 = vmatpush1.bf16.msra.mxu0 0
          %2047 = vmatprep.subr.bf16.mxu0 0
          %2048 = vmatpush1.bf16.msra.mxu0 0
          %2049 = vmatprep.subr.bf16.mxu0 0
          %2050 = vmatpush1.bf16.msra.mxu0 0
          %2051 = vmatprep.subr.bf16.mxu0 0
          %2052 = vmatpush1.bf16.msra.mxu0 0
          %2053 = vmatprep.subr.bf16.mxu0 0
          %2054 = vmatpush1.bf16.msra.mxu0 0
          %2055 = vmatprep.subr.bf16.mxu0 0
          %2056 = vmatpush1.bf16.msra.mxu0 0
          %2057 = vmatprep.subr.bf16.mxu0 0
          %2058 = vmatpush1.bf16.msra.mxu0 0
          %2059 = vmatprep.subr.bf16.mxu0 0
          %2060 = vmatpush1.bf16.msra.mxu0 0
          %2061 = vmatprep.subr.bf16.mxu0 0
          %2062 = vmatpush1.bf16.msra.mxu0 0
          %2063 = vmatprep.subr.bf16.mxu0 0
          %2064 = vmatpush1.bf16.msra.mxu0 0
          %2065 = vmatprep.subr.bf16.mxu0 0
          %2066 = vmatpush1.bf16.msra.mxu0 0
          %2067 = vmatprep.mubr.bf16.mxu0 0
          %2068 = vmatmul.mubr.bf16.gmra.mrb[0].mxu0 %v2030
          %v2069 = vpop.f32.mrb[0].mxu0
          %v2070 = vadd.f32 0.0, %v2069
          %v2071 = vpop.f32.mrb[0].mxu0
          %v2072 = vpop.f32.mrb[0].mxu0
          %v2073 = vadd.f32 0.0, %v2072
          %v2074 = vpop.f32.mrb[0].mxu0
          %2075 = vdwg.mxu0
          %v2076 = vadd.f32 %v2018, %v2070
          %v2077 = vadd.f32 %v2019, %v2073
          %s2078 = smul.u32 %s349, 16
          %s2079 = scalar_lea.vmem %s307, %s2078 [#allocation2]
          %2080 = vst [vmem:[%s2079] sm:$0xff] %v2076
          %2081 = vst [vmem:[%s2079 + $0x8] sm:$0xff] %v2077
          %v2082 = vld [vmem:[%s314] sm:$0x1]
          %v2083 = vadd.f32 %v2076, %v2077
          %v2084 = vrot.slane %v2083, 4
          %v2085 = vadd.f32 %v2083, %v2084
          %v2086 = vrot.slane %v2085, 2
          %v2087 = vadd.f32 %v2085, %v2086
          %v2088 = vrot.slane %v2087, 1
          %v2089 = vadd.f32 %v2087, %v2088
          %v2090 = vadd.f32 %v2082, %v2089
          %2091 = vst [vmem:[%s314] sm:$0x1] %v2090
          %v2092 = vld [vmem:[%s314 + $0x1] sm:$0x1]
          %v2093 = vmul.f32 %v2076, %v2076
          %v2094 = vmul.f32 %v2077, %v2077
          %v2095 = vadd.f32 %v2093, %v2094
          %v2096 = vrot.slane %v2095, 4
          %v2097 = vadd.f32 %v2095, %v2096
          %v2098 = vrot.slane %v2097, 2
          %v2099 = vadd.f32 %v2097, %v2098
          %v2100 = vrot.slane %v2099, 1
          %v2101 = vadd.f32 %v2099, %v2100
          %v2102 = vadd.f32 %v2092, %v2101
          %2103 = vst [vmem:[%s314 + $0x1] sm:$0x1] %v2102
        $region41: #{tpu_custom_call.1} parent=35 // loop_footer
          %s353 = sadd.s32 1, %s349
        $region42: #{tpu_custom_call.1} parent=35 // loop_footer_branch
          %348 = sbr.rel target = $region38
        $region43: #{tpu_custom_call.1} parent=35 // loop_exit
          _
        %s2104 = sand.u32 %s154, 1
        %s2105 = scalar_lea.sflag [#allocation3], %s2104
        %s2106 = sand.u32 %s154, 1
        %s2107 = smul.addr %s2106, 256
        %s2108 = scalar_lea.vmem [#allocation2], %s2107
        %s2109 = sand.u32 %s182, 1
        %s2110 = scalar_lea.sflag [#allocation5], %s2109
        %s2111 = sand.u32 %s182, 1
        %s2112 = smul.addr %s2111, 2
        %s2113 = scalar_lea.vmem [#allocation4], %s2112
        // Predicated region
        $region44: #{tpu_custom_call.1} parent=35 // pred_check
          %p2114 = pneg %p164
        $region45: #{tpu_custom_call.1} parent=35 // pred_check_branch
          %2116 = sbr.rel (%p2114) target = $region47
        $region46: #{tpu_custom_call.1} parent=35 // pred_region
          %s2118 = ssub.s32 4096, 4096
          %2119 = vsyncadd %s2105, %s2118
          %s2120 = smul.addr %s28, 32
          %s2121 = smul.addr %s27, 512
          %s2122 = sadd.s32 %s2120, %s2121
          %s2123 = smul.addr %s2122, 128
          %s2124 = scalar_lea.hbm %s4, %s2123
          %s2125 = sshll.u32 %s2108, 4
          %s2126 = int_to_ptr.vmem [resolvable:$true] %s2125
          %2131 = dma.vmem_to_hbm [thread:$0]  %s2126, 4096, %s2124, %s2105, 128, 128, 8
        $region47: #{tpu_custom_call.1} parent=35 // pred_fallthru
          _
        // Predicated region
        $region48: #{tpu_custom_call.1} parent=35 // pred_check
          %p2132 = pneg %p192
        $region49: #{tpu_custom_call.1} parent=35 // pred_check_branch
          %2134 = sbr.rel (%p2132) target = $region51
        $region50: #{tpu_custom_call.1} parent=35 // pred_region
          %s2136 = ssub.s32 32, 32
          %2137 = vsyncadd %s2110, %s2136
          %s2138 = smul.addr %s27, 16
          %s2139 = sadd.s32 %s28, %s2138
          %s2140 = smul.addr %s2139, 32
          %s2141 = scalar_lea.hbm %s5, %s2140
          %s2143 = sshll.u32 %s2113, 4
          %s2144 = int_to_ptr.vmem [resolvable:$true] %s2143
          %2146 = dma.vmem_to_hbm [thread:$0]  %s2144, 32, %s2141, %s2110
        $region51: #{tpu_custom_call.1} parent=35 // pred_fallthru
          _
      $region36: #{tpu_custom_call.1} parent=5 // pred_fallthru
        _
      %p2147 = scmp.le.s32.totalorder 2, %s18
      // Predicated region
      $region52: #{tpu_custom_call.1} parent=5 // pred_check
        %p2148 = pneg %p2147
      $region53: #{tpu_custom_call.1} parent=5 // pred_check_branch
        %2150 = sbr.rel (%p2148) target = $region55
      $region54: #{tpu_custom_call.1} parent=5 // pred_region
        %s2151 = ssub.s32 %s18, 2
        // Predicated region
        $region56: #{tpu_custom_call.1} parent=54 // pred_check
          %p2152 = pneg %p170
        $region57: #{tpu_custom_call.1} parent=54 // pred_check_branch
          %2154 = sbr.rel (%p2152) target = $region59
        $region58: #{tpu_custom_call.1} parent=54 // pred_region
          %s2155 = sand.u32 %s155, 1
          %s2156 = scalar_lea.sflag [#allocation3], %s2155
          %s2157 = sand.u32 %s155, 1
          %s2158 = smul.addr %s2157, 256
          %s2159 = scalar_lea.vmem [#allocation2], %s2158
          %2160 = dma.done %s2156, 4096
        $region59: #{tpu_custom_call.1} parent=54 // pred_fallthru
          _
        // Predicated region
        $region60: #{tpu_custom_call.1} parent=54 // pred_check
          %p2161 = pneg %p198
        $region61: #{tpu_custom_call.1} parent=54 // pred_check_branch
          %2163 = sbr.rel (%p2161) target = $region63
        $region62: #{tpu_custom_call.1} parent=54 // pred_region
          %s2164 = sand.u32 %s183, 1
          %s2165 = scalar_lea.sflag [#allocation5], %s2164
          %s2166 = sand.u32 %s183, 1
          %s2167 = smul.addr %s2166, 2
          %s2168 = scalar_lea.vmem [#allocation4], %s2167
          %2169 = dma.done %s2165, 32
        $region63: #{tpu_custom_call.1} parent=54 // pred_fallthru
          _
      $region55: #{tpu_custom_call.1} parent=5 // pred_fallthru
        _
    $region6: #{tpu_custom_call.1} parent=1 // loop_footer
      %s22 = sadd.s32 1, %s18
    $region7: #{tpu_custom_call.1} parent=1 // loop_footer_branch
      %17 = sbr.rel target = $region3
    $region8: #{tpu_custom_call.1} parent=1 // loop_exit
      _
    %2170 = vsyncpa [#allocation3], 1
    %s2171 = scalar_lea.sflag [#allocation3], 1
    %2172 = vsyncpa %s2171, 1
    %2173 = vsyncpa [#allocation5], 1
    %s2174 = scalar_lea.sflag [#allocation5], 1
    %2175 = vsyncpa %s2174, 1

</llo_original>
